<compile_context>
chip_gen: v5e
topology: v5e:2x2
jax: 0.10.0
libtpu: 0.0.40
codegen_flags: <defaults>
</compile_context>

<pallas_src>
import functools
import numpy as np
import jax
import jax.numpy as jnp
from jax.experimental import pallas as pl
from jax.experimental.pallas import tpu as pltpu


# ----------------------------- Pallas kernel ------------------------------

def _block_kernel(x_ref, ln1g_ref, ln1b_ref, wqkv_ref, wout_ref, bout_ref,
                  ln2g_ref, ln2b_ref, w1_ref, b1_ref, w2_ref, b2_ref,
                  xo_ref, attn_ref, *, heads, dim_head, seq_len, block_b,
                  attn_pad, mm_dtype, eps=1e-5):
    """One full transformer block for `block_b` batch rows."""
    f32 = jnp.float32
    H, dh, N = heads, dim_head, seq_len
    inner = H * dh
    scale = float(dh) ** -0.5
    inv_sqrt2 = np.float32(1.0 / np.sqrt(2.0))

    def layernorm(z, g, b):
        mu = jnp.mean(z, axis=-1, keepdims=True)
        var = jnp.mean((z - mu) ** 2, axis=-1, keepdims=True)
        return (z - mu) * jax.lax.rsqrt(var + eps) * g + b

    # Matmul weights arrive already cast to mm_dtype (bf16); LN params / biases in f32.
    ln1g, ln1b = ln1g_ref[...], ln1b_ref[...]
    ln2g, ln2b = ln2g_ref[...], ln2b_ref[...]
    wqkv, wout, bout = wqkv_ref[...], wout_ref[...], bout_ref[...]
    w1, b1, w2, b2 = w1_ref[...], b1_ref[...], w2_ref[...], b2_ref[...]

    for bb in range(block_b):                                   # static, block_b is small
        xb = x_ref[bb].astype(f32)                              # (N, D)

        # ---- PreNorm + Attention (head-batched, bf16 MXU ops, f32 accumulation) ----
        h1 = layernorm(xb, ln1g, ln1b)
        qkv = jnp.dot(h1.astype(mm_dtype), wqkv,
                      preferred_element_type=f32)               # (N, 3*inner)
        q = qkv[:, :inner] * scale                              # scale folded into q
        k = qkv[:, inner:2 * inner]
        v = qkv[:, 2 * inner:]

        def to_heads(t):                                        # (N, H*dh) -> (H, N, dh)
            return jnp.transpose(t.reshape(N, H, dh), (1, 0, 2))

        qh = to_heads(q.astype(mm_dtype))
        kh = to_heads(k.astype(mm_dtype))
        vh = to_heads(v.astype(mm_dtype))

        dots = jnp.einsum("hnd,hmd->hnm", qh, kh,
                          preferred_element_type=f32)           # (H, N, N)
        dots = dots - jnp.max(dots, axis=-1, keepdims=True)
        e = jnp.exp(dots)
        denom = jnp.sum(e, axis=-1, keepdims=True)
        attn = e * pl.reciprocal(denom, approx=False)           # softmax(dim=-1)

        # lane-dense attention-weights store (last dim padded up to a multiple of 128)
        attn_st = attn
        if attn_pad > N:
            attn_st = jnp.concatenate(
                [attn, jnp.zeros((H, N, attn_pad - N), f32)], axis=-1)
        attn_ref[bb] = attn_st.astype(attn_ref.dtype)

        out_h = jnp.einsum("hnm,hmd->hnd", attn.astype(mm_dtype), vh,
                           preferred_element_type=f32)          # (H, N, dh)
        out = jnp.transpose(out_h, (1, 0, 2)).reshape(N, inner)  # 'h n d -> n (h d)'
        attn_out = jnp.dot(out.astype(mm_dtype), wout,
                           preferred_element_type=f32) + bout
        x2 = xb + attn_out                                      # residual 1

        # ---- PreNorm + FeedForward ----
        h2 = layernorm(x2, ln2g, ln2b)
        a1 = jnp.dot(h2.astype(mm_dtype), w1, preferred_element_type=f32) + b1
        g1 = 0.5 * a1 * (1.0 + jax.lax.erf(a1 * inv_sqrt2))     # exact (erf) GELU
        ff = jnp.dot(g1.astype(mm_dtype), w2, preferred_element_type=f32) + b2
        xo_ref[bb] = (x2 + ff).astype(xo_ref.dtype)             # residual 2


def transformer_block_pallas(x, p, *, heads, dim_head, block_b=1,
                             mm_dtype=jnp.bfloat16):
    """Run one transformer block. x: (B, N, D). p: dict of params for this layer."""
    B, N, D = x.shape
    H, dh = heads, dim_head
    assert B % block_b == 0, "block_b must divide the batch"
    n_pad = ((N + 127) // 128) * 128        # lane-dense attention output width

    # Cast the four big matmul weights to bf16 once (halves weight DMA + VMEM);
    # LayerNorm params and biases stay f32.
    weights = [p["ln1_g"], p["ln1_b"],
               p["w_qkv"].astype(mm_dtype), p["w_out"].astype(mm_dtype), p["b_out"],
               p["ln2_g"], p["ln2_b"],
               p["w1"].astype(mm_dtype), p["b1"],
               p["w2"].astype(mm_dtype), p["b2"]]

    def full_spec(w):
        nd = w.ndim
        return pl.BlockSpec(w.shape, lambda i, _nd=nd: (0,) * _nd)

    in_specs = [pl.BlockSpec((block_b, N, D), lambda i: (i, 0, 0))] \
        + [full_spec(w) for w in weights]
    out_specs = [pl.BlockSpec((block_b, N, D), lambda i: (i, 0, 0)),
                 pl.BlockSpec((block_b, H, N, n_pad), lambda i: (i, 0, 0, 0))]
    out_shape = (jax.ShapeDtypeStruct((B, N, D), x.dtype),
                 jax.ShapeDtypeStruct((B, H, N, n_pad), jnp.float32))

    kernel = functools.partial(_block_kernel, heads=H, dim_head=dh, seq_len=N,
                               block_b=block_b, attn_pad=n_pad, mm_dtype=mm_dtype)
    xo, attn_p = pl.pallas_call(
        kernel,
        grid=(B // block_b,),
        in_specs=in_specs,
        out_specs=out_specs,
        out_shape=out_shape,
        # x is dead after this block; let xo reuse its HBM buffer.
        input_output_aliases={0: 0},
        compiler_params=pltpu.CompilerParams(
            dimension_semantics=("parallel",),          # megacore sharding on v7x
            vmem_limit_bytes=48 * 1024 * 1024,          # raise scoped VMEM (tune per chip)
        ),
    )(x, *weights)
    return xo, attn_p[..., :N]                          # drop lane padding


# --------------------------- Parameter creation ----------------------------

def make_params(key, depth, dim, heads, dim_head, mlp_dim):
    inner = heads * dim_head
    layers = []
    for _ in range(depth):
        keys = jax.random.split(key, 8)
        key = keys[-1]
        layers.append(dict(
            ln1_g=jnp.ones((1, dim), jnp.float32),
            ln1_b=jnp.zeros((1, dim), jnp.float32),
            w_qkv=0.05 * jax.random.normal(keys[0], (dim, 3 * inner), jnp.float32),
            w_out=0.05 * jax.random.normal(keys[1], (inner, dim), jnp.float32),
            b_out=0.01 * jax.random.normal(keys[2], (1, dim), jnp.float32),
            ln2_g=jnp.ones((1, dim), jnp.float32),
            ln2_b=jnp.zeros((1, dim), jnp.float32),
            w1=0.05 * jax.random.normal(keys[3], (dim, mlp_dim), jnp.float32),
            b1=0.01 * jax.random.normal(keys[4], (1, mlp_dim), jnp.float32),
            w2=0.05 * jax.random.normal(keys[5], (mlp_dim, dim), jnp.float32),
            b2=0.01 * jax.random.normal(keys[6], (1, dim), jnp.float32),
        ))
    return layers


@functools.partial(jax.jit, static_argnames=("heads", "dim_head", "block_b"))
def transformer_forward(x, layer_params, *, heads, dim_head, block_b=1):
    attn_weights = []
    for p in layer_params:
        x, attn = transformer_block_pallas(x, p, heads=heads, dim_head=dim_head,
                                           block_b=block_b)
        attn_weights.append(attn)
    return x, attn_weights


# ---------------------------- Pure-JAX reference ---------------------------
# Mirrors the kernel's bf16 matmul operands (f32 accumulation) so the comparison
# is apples-to-apples; set mm_dtype=jnp.float32 for exact PyTorch-f32 semantics.

def _ref_block(x, p, heads, dim_head, mm_dtype=jnp.bfloat16, eps=1e-5):
    f32 = jnp.float32

    def ln(z, g, b):
        mu = jnp.mean(z, axis=-1, keepdims=True)
        var = jnp.mean((z - mu) ** 2, axis=-1, keepdims=True)
        return (z - mu) * jax.lax.rsqrt(var + eps) * g + b

    def mm(a, w):
        return jnp.matmul(a.astype(mm_dtype), w.astype(mm_dtype),
                          preferred_element_type=f32)

    B, N, D = x.shape
    H, dh = heads, dim_head
    inner = H * dh
    h1 = ln(x, p["ln1_g"][0], p["ln1_b"][0])
    qkv = mm(h1, p["w_qkv"])
    q, k, v = jnp.split(qkv, 3, axis=-1)
    q = q.reshape(B, N, H, dh).transpose(0, 2, 1, 3) * (float(dh) ** -0.5)
    k = k.reshape(B, N, H, dh).transpose(0, 2, 1, 3)
    v = v.reshape(B, N, H, dh).transpose(0, 2, 1, 3)
    dots = jnp.einsum("bhnd,bhmd->bhnm", q.astype(mm_dtype), k.astype(mm_dtype),
                      preferred_element_type=f32)
    attn = jax.nn.softmax(dots, axis=-1)
    out = jnp.einsum("bhnm,bhmd->bhnd", attn.astype(mm_dtype), v.astype(mm_dtype),
                     preferred_element_type=f32)
    out = out.transpose(0, 2, 1, 3).reshape(B, N, inner)
    x2 = x + mm(out, p["w_out"]) + p["b_out"][0]
    h2 = ln(x2, p["ln2_g"][0], p["ln2_b"][0])
    a1 = mm(h2, p["w1"]) + p["b1"][0]
    g1 = 0.5 * a1 * (1.0 + jax.lax.erf(a1 * np.float32(1.0 / np.sqrt(2.0))))
    xo = x2 + mm(g1, p["w2"]) + p["b2"][0]
    return xo, attn


# ---------------------------------- main -----------------------------------

if __name__ == "__main__":
    B, N, D = 2, 8, 32          # batch, seq, dim
    heads, dim_head = 4, 8
    mlp_dim, depth = 64, 2

    key = jax.random.PRNGKey(0)
    kx, kp = jax.random.split(key)
    x = jax.random.normal(kx, (B, N, D), jnp.float32)
    params = make_params(kp, depth, D, heads, dim_head, mlp_dim)

    # Reference first (x is aliased/donated inside the Pallas forward), then kernel.
    y_ref = x
    attn_refs = []
    for p in params:
        y_ref, a_ref = _ref_block(y_ref, p, heads, dim_head)
        attn_refs.append(a_ref)
    y_ref = jax.block_until_ready(y_ref)

    y, attn_ws = transformer_forward(x, params, heads=heads, dim_head=dim_head)
    y = jax.block_until_ready(y)
    attn_ws = [jax.block_until_ready(a) for a in attn_ws]

    # correctness check vs the bf16-matched pure-JAX reference
    for a_k, a_r in zip(attn_ws, attn_refs):
        np.testing.assert_allclose(np.asarray(a_k), np.asarray(a_r),
                                   rtol=2e-2, atol=2e-2)
    np.testing.assert_allclose(np.asarray(y), np.asarray(y_ref), rtol=2e-2, atol=2e-2)

    print("KERNEL_OK")
</pallas_src>

<mosaic_0001>
module attributes {stable_mosaic.version = 11 : i64} {
  func.func @_block_kernel(%arg0: i32, %arg1: memref<1x8x32xf32, #tpu.memory_space<vmem>>, %arg2: memref<1x32xf32, #tpu.memory_space<vmem>>, %arg3: memref<1x32xf32, #tpu.memory_space<vmem>>, %arg4: memref<32x96xbf16, #tpu.memory_space<vmem>>, %arg5: memref<32x32xbf16, #tpu.memory_space<vmem>>, %arg6: memref<1x32xf32, #tpu.memory_space<vmem>>, %arg7: memref<1x32xf32, #tpu.memory_space<vmem>>, %arg8: memref<1x32xf32, #tpu.memory_space<vmem>>, %arg9: memref<32x64xbf16, #tpu.memory_space<vmem>>, %arg10: memref<1x64xf32, #tpu.memory_space<vmem>>, %arg11: memref<64x32xbf16, #tpu.memory_space<vmem>>, %arg12: memref<1x32xf32, #tpu.memory_space<vmem>>, %arg13: memref<1x8x32xf32, #tpu.memory_space<vmem>>, %arg14: memref<1x4x8x128xf32, #tpu.memory_space<vmem>>) attributes {dimension_semantics = [#tpu.dimension_semantics<parallel>], iteration_bounds = array<i64: 2>, scalar_prefetch = 0 : i64, scratch_operands = 0 : i64, tpu.core_type = #tpu.core_type<tc>, window_params = [{transform_indices = @transform_0, window_bounds = array<i64: 1, 8, 32>}, {pipeline_mode = #tpu.pipeline_mode<synchronous>, transform_indices = @transform_1, window_bounds = array<i64: 1, 32>}, {pipeline_mode = #tpu.pipeline_mode<synchronous>, transform_indices = @transform_2, window_bounds = array<i64: 1, 32>}, {pipeline_mode = #tpu.pipeline_mode<synchronous>, transform_indices = @transform_3, window_bounds = array<i64: 32, 96>}, {pipeline_mode = #tpu.pipeline_mode<synchronous>, transform_indices = @transform_4, window_bounds = array<i64: 32, 32>}, {pipeline_mode = #tpu.pipeline_mode<synchronous>, transform_indices = @transform_5, window_bounds = array<i64: 1, 32>}, {pipeline_mode = #tpu.pipeline_mode<synchronous>, transform_indices = @transform_6, window_bounds = array<i64: 1, 32>}, {pipeline_mode = #tpu.pipeline_mode<synchronous>, transform_indices = @transform_7, window_bounds = array<i64: 1, 32>}, {pipeline_mode = #tpu.pipeline_mode<synchronous>, transform_indices = @transform_8, window_bounds = array<i64: 32, 64>}, {pipeline_mode = #tpu.pipeline_mode<synchronous>, transform_indices = @transform_9, window_bounds = array<i64: 1, 64>}, {pipeline_mode = #tpu.pipeline_mode<synchronous>, transform_indices = @transform_10, window_bounds = array<i64: 64, 32>}, {pipeline_mode = #tpu.pipeline_mode<synchronous>, transform_indices = @transform_11, window_bounds = array<i64: 1, 32>}, {transform_indices = @transform_12, window_bounds = array<i64: 1, 8, 32>}, {transform_indices = @transform_13, window_bounds = array<i64: 1, 4, 8, 128>}]} {
    %c0 = arith.constant 0 : index
    %c0_0 = arith.constant 0 : index
    %0 = vector.load %arg2[%c0, %c0_0] : memref<1x32xf32, #tpu.memory_space<vmem>>, vector<1x32xf32>
    %c0_1 = arith.constant 0 : index
    %c0_2 = arith.constant 0 : index
    %1 = vector.load %arg3[%c0_1, %c0_2] : memref<1x32xf32, #tpu.memory_space<vmem>>, vector<1x32xf32>
    %c0_3 = arith.constant 0 : index
    %c0_4 = arith.constant 0 : index
    %2 = vector.load %arg7[%c0_3, %c0_4] : memref<1x32xf32, #tpu.memory_space<vmem>>, vector<1x32xf32>
    %c0_5 = arith.constant 0 : index
    %c0_6 = arith.constant 0 : index
    %3 = vector.load %arg8[%c0_5, %c0_6] : memref<1x32xf32, #tpu.memory_space<vmem>>, vector<1x32xf32>
    %c0_7 = arith.constant 0 : index
    %c0_8 = arith.constant 0 : index
    %4 = vector.load %arg4[%c0_7, %c0_8] : memref<32x96xbf16, #tpu.memory_space<vmem>>, vector<32x96xbf16>
    %c0_9 = arith.constant 0 : index
    %c0_10 = arith.constant 0 : index
    %5 = vector.load %arg5[%c0_9, %c0_10] : memref<32x32xbf16, #tpu.memory_space<vmem>>, vector<32x32xbf16>
    %c0_11 = arith.constant 0 : index
    %c0_12 = arith.constant 0 : index
    %6 = vector.load %arg6[%c0_11, %c0_12] : memref<1x32xf32, #tpu.memory_space<vmem>>, vector<1x32xf32>
    %c0_13 = arith.constant 0 : index
    %c0_14 = arith.constant 0 : index
    %7 = vector.load %arg9[%c0_13, %c0_14] : memref<32x64xbf16, #tpu.memory_space<vmem>>, vector<32x64xbf16>
    %c0_15 = arith.constant 0 : index
    %c0_16 = arith.constant 0 : index
    %8 = vector.load %arg10[%c0_15, %c0_16] : memref<1x64xf32, #tpu.memory_space<vmem>>, vector<1x64xf32>
    %c0_17 = arith.constant 0 : index
    %c0_18 = arith.constant 0 : index
    %9 = vector.load %arg11[%c0_17, %c0_18] : memref<64x32xbf16, #tpu.memory_space<vmem>>, vector<64x32xbf16>
    %c0_19 = arith.constant 0 : index
    %c0_20 = arith.constant 0 : index
    %10 = vector.load %arg12[%c0_19, %c0_20] : memref<1x32xf32, #tpu.memory_space<vmem>>, vector<1x32xf32>
    %c0_21 = arith.constant 0 : index
    %c0_22 = arith.constant 0 : index
    %c0_23 = arith.constant 0 : index
    %11 = vector.load %arg1[%c0_21, %c0_22, %c0_23] : memref<1x8x32xf32, #tpu.memory_space<vmem>>, vector<1x8x32xf32>
    %12 = vector.shape_cast %11 : vector<1x8x32xf32> to vector<8x32xf32>
    %cst = arith.constant dense<0.000000e+00> : vector<8xf32>
    %13 = vector.multi_reduction <add>, %12, %cst [1] : vector<8x32xf32> to vector<8xf32>
    %14 = vector.shape_cast %13 : vector<8xf32> to vector<8x1xf32>
    %cst_24 = arith.constant 3.200000e+01 : f32
    %15 = vector.broadcast %cst_24 : f32 to vector<8x1xf32>
    %16 = arith.divf %14, %15 : vector<8x1xf32>
    %17 = vector.broadcast %16 : vector<8x1xf32> to vector<8x32xf32>
    %18 = arith.subf %12, %17 : vector<8x32xf32>
    %19 = arith.mulf %18, %18 : vector<8x32xf32>
    %cst_25 = arith.constant dense<0.000000e+00> : vector<8xf32>
    %20 = vector.multi_reduction <add>, %19, %cst_25 [1] : vector<8x32xf32> to vector<8xf32>
    %21 = vector.shape_cast %20 : vector<8xf32> to vector<8x1xf32>
    %cst_26 = arith.constant 3.200000e+01 : f32
    %22 = vector.broadcast %cst_26 : f32 to vector<8x1xf32>
    %23 = arith.divf %21, %22 : vector<8x1xf32>
    %24 = vector.broadcast %16 : vector<8x1xf32> to vector<8x32xf32>
    %25 = arith.subf %12, %24 : vector<8x32xf32>
    %cst_27 = arith.constant 9.99999974E-6 : f32
    %26 = vector.broadcast %cst_27 : f32 to vector<8x1xf32>
    %27 = arith.addf %23, %26 : vector<8x1xf32>
    %28 = math.rsqrt %27 : vector<8x1xf32>
    %29 = vector.broadcast %28 : vector<8x1xf32> to vector<8x32xf32>
    %30 = arith.mulf %25, %29 : vector<8x32xf32>
    %31 = vector.broadcast %0 : vector<1x32xf32> to vector<8x32xf32>
    %32 = arith.mulf %30, %31 : vector<8x32xf32>
    %33 = vector.broadcast %1 : vector<1x32xf32> to vector<8x32xf32>
    %34 = arith.addf %32, %33 : vector<8x32xf32>
    %35 = arith.truncf %34 : vector<8x32xf32> to vector<8x32xbf16>
    %cst_28 = arith.constant dense<0.000000e+00> : vector<8x96xf32>
    %36 = tpu.matmul %35, %4, %cst_28 {dimension_numbers = #tpu.dot_dimension_numbers<[1], [0], [0], [1], [0, 0, 1, 1], [], []>} : vector<8x32xbf16>, vector<32x96xbf16>, vector<8x96xf32> -> vector<8x96xf32>
    %37 = vector.extract_strided_slice %36 {offsets = [0, 0], sizes = [8, 32], strides = [1, 1]} : vector<8x96xf32> to vector<8x32xf32>
    %cst_29 = arith.constant 0.353553385 : f32
    %38 = vector.broadcast %cst_29 : f32 to vector<8x32xf32>
    %39 = arith.mulf %37, %38 : vector<8x32xf32>
    %40 = vector.extract_strided_slice %36 {offsets = [0, 32], sizes = [8, 32], strides = [1, 1]} : vector<8x96xf32> to vector<8x32xf32>
    %41 = vector.extract_strided_slice %36 {offsets = [0, 64], sizes = [8, 32], strides = [1, 1]} : vector<8x96xf32> to vector<8x32xf32>
    %42 = arith.truncf %39 : vector<8x32xf32> to vector<8x32xbf16>
    %43 = vector.shape_cast %42 : vector<8x32xbf16> to vector<8x4x8xbf16>
    %44 = tpu.transpose %43, [1, 0, 2] : vector<8x4x8xbf16> -> vector<4x8x8xbf16>
    %45 = arith.truncf %40 : vector<8x32xf32> to vector<8x32xbf16>
    %46 = vector.shape_cast %45 : vector<8x32xbf16> to vector<8x4x8xbf16>
    %47 = tpu.transpose %46, [1, 0, 2] : vector<8x4x8xbf16> -> vector<4x8x8xbf16>
    %48 = arith.truncf %41 : vector<8x32xf32> to vector<8x32xbf16>
    %49 = vector.shape_cast %48 : vector<8x32xbf16> to vector<8x4x8xbf16>
    %50 = tpu.transpose %49, [1, 0, 2] : vector<8x4x8xbf16> -> vector<4x8x8xbf16>
    "tpu.trace_start"() <{level = 10 : i32, message = "hnd,hmd->hnm"}> : () -> ()
    %cst_30 = arith.constant dense<0.000000e+00> : vector<4x8x8xf32>
    %51 = tpu.matmul %44, %47, %cst_30 {dimension_numbers = #tpu.dot_dimension_numbers<[2], [2], [1], [1], [0, 0, 0, 1, 1, 1], [0], [0]>} : vector<4x8x8xbf16>, vector<4x8x8xbf16>, vector<4x8x8xf32> -> vector<4x8x8xf32>
    "tpu.trace_stop"() : () -> ()
    %cst_31 = arith.constant dense<0xFF800000> : vector<4x8xf32>
    %52 = vector.multi_reduction <maximumf>, %51, %cst_31 [2] : vector<4x8x8xf32> to vector<4x8xf32>
    %53 = vector.shape_cast %52 : vector<4x8xf32> to vector<4x8x1xf32>
    %54 = vector.broadcast %53 : vector<4x8x1xf32> to vector<4x8x8xf32>
    %55 = arith.subf %51, %54 : vector<4x8x8xf32>
    %56 = math.exp %55 : vector<4x8x8xf32>
    %cst_32 = arith.constant dense<0.000000e+00> : vector<4x8xf32>
    %57 = vector.multi_reduction <add>, %56, %cst_32 [2] : vector<4x8x8xf32> to vector<4x8xf32>
    %58 = vector.shape_cast %57 : vector<4x8xf32> to vector<4x8x1xf32>
    %59 = tpu.reciprocal %58 : vector<4x8x1xf32> -> vector<4x8x1xf32>
    %60 = vector.broadcast %59 : vector<4x8x1xf32> to vector<4x8x8xf32>
    %61 = arith.mulf %56, %60 : vector<4x8x8xf32>
    %cst_33 = arith.constant 0.000000e+00 : f32
    %62 = vector.broadcast %cst_33 : f32 to vector<4x8x120xf32>
    %63 = tpu.concatenate %61, %62 in 2 : vector<4x8x8xf32>, vector<4x8x120xf32> -> vector<4x8x128xf32>
    %c0_34 = arith.constant 0 : index
    %c0_35 = arith.constant 0 : index
    %c0_36 = arith.constant 0 : index
    %c0_37 = arith.constant 0 : index
    %64 = vector.load %arg14[%c0_34, %c0_35, %c0_36, %c0_37] : memref<1x4x8x128xf32, #tpu.memory_space<vmem>>, vector<1x4x8x128xf32>
    %65 = vector.shape_cast %64 : vector<1x4x8x128xf32> to vector<4x8x128xf32>
    %66 = vector.shape_cast %63 : vector<4x8x128xf32> to vector<1x4x8x128xf32>
    tpu.vector_store %arg14[%c0_34, %c0_35, %c0_36, %c0_37], %66 {strides = array<i32>} : memref<1x4x8x128xf32, #tpu.memory_space<vmem>>, vector<1x4x8x128xf32>,
    %67 = arith.truncf %61 : vector<4x8x8xf32> to vector<4x8x8xbf16>
    "tpu.trace_start"() <{level = 10 : i32, message = "hnm,hmd->hnd"}> : () -> ()
    %cst_38 = arith.constant dense<0.000000e+00> : vector<4x8x8xf32>
    %68 = tpu.matmul %67, %50, %cst_38 {dimension_numbers = #tpu.dot_dimension_numbers<[2], [1], [1], [2], [0, 0, 0, 1, 1, 2], [0], [0]>} : vector<4x8x8xbf16>, vector<4x8x8xbf16>, vector<4x8x8xf32> -> vector<4x8x8xf32>
    "tpu.trace_stop"() : () -> ()
    %69 = tpu.transpose %68, [1, 0, 2] : vector<4x8x8xf32> -> vector<8x4x8xf32>
    %70 = vector.shape_cast %69 : vector<8x4x8xf32> to vector<8x32xf32>
    %71 = arith.truncf %70 : vector<8x32xf32> to vector<8x32xbf16>
    %cst_39 = arith.constant dense<0.000000e+00> : vector<8x32xf32>
    %72 = tpu.matmul %71, %5, %cst_39 {dimension_numbers = #tpu.dot_dimension_numbers<[1], [0], [0], [1], [0, 0, 1, 1], [], []>} : vector<8x32xbf16>, vector<32x32xbf16>, vector<8x32xf32> -> vector<8x32xf32>
    %73 = vector.broadcast %6 : vector<1x32xf32> to vector<8x32xf32>
    %74 = arith.addf %72, %73 : vector<8x32xf32>
    %75 = arith.addf %12, %74 : vector<8x32xf32>
    %cst_40 = arith.constant dense<0.000000e+00> : vector<8xf32>
    %76 = vector.multi_reduction <add>, %75, %cst_40 [1] : vector<8x32xf32> to vector<8xf32>
    %77 = vector.shape_cast %76 : vector<8xf32> to vector<8x1xf32>
    %cst_41 = arith.constant 3.200000e+01 : f32
    %78 = vector.broadcast %cst_41 : f32 to vector<8x1xf32>
    %79 = arith.divf %77, %78 : vector<8x1xf32>
    %80 = vector.broadcast %79 : vector<8x1xf32> to vector<8x32xf32>
    %81 = arith.subf %75, %80 : vector<8x32xf32>
    %82 = arith.mulf %81, %81 : vector<8x32xf32>
    %cst_42 = arith.constant dense<0.000000e+00> : vector<8xf32>
    %83 = vector.multi_reduction <add>, %82, %cst_42 [1] : vector<8x32xf32> to vector<8xf32>
    %84 = vector.shape_cast %83 : vector<8xf32> to vector<8x1xf32>
    %cst_43 = arith.constant 3.200000e+01 : f32
    %85 = vector.broadcast %cst_43 : f32 to vector<8x1xf32>
    %86 = arith.divf %84, %85 : vector<8x1xf32>
    %87 = vector.broadcast %79 : vector<8x1xf32> to vector<8x32xf32>
    %88 = arith.subf %75, %87 : vector<8x32xf32>
    %cst_44 = arith.constant 9.99999974E-6 : f32
    %89 = vector.broadcast %cst_44 : f32 to vector<8x1xf32>
    %90 = arith.addf %86, %89 : vector<8x1xf32>
    %91 = math.rsqrt %90 : vector<8x1xf32>
    %92 = vector.broadcast %91 : vector<8x1xf32> to vector<8x32xf32>
    %93 = arith.mulf %88, %92 : vector<8x32xf32>
    %94 = vector.broadcast %2 : vector<1x32xf32> to vector<8x32xf32>
    %95 = arith.mulf %93, %94 : vector<8x32xf32>
    %96 = vector.broadcast %3 : vector<1x32xf32> to vector<8x32xf32>
    %97 = arith.addf %95, %96 : vector<8x32xf32>
    %98 = arith.truncf %97 : vector<8x32xf32> to vector<8x32xbf16>
    %cst_45 = arith.constant dense<0.000000e+00> : vector<8x64xf32>
    %99 = tpu.matmul %98, %7, %cst_45 {dimension_numbers = #tpu.dot_dimension_numbers<[1], [0], [0], [1], [0, 0, 1, 1], [], []>} : vector<8x32xbf16>, vector<32x64xbf16>, vector<8x64xf32> -> vector<8x64xf32>
    %100 = vector.broadcast %8 : vector<1x64xf32> to vector<8x64xf32>
    %101 = arith.addf %99, %100 : vector<8x64xf32>
    %cst_46 = arith.constant 5.000000e-01 : f32
    %102 = vector.broadcast %cst_46 : f32 to vector<8x64xf32>
    %103 = arith.mulf %102, %101 : vector<8x64xf32>
    %cst_47 = arith.constant 0.707106769 : f32
    %104 = vector.broadcast %cst_47 : f32 to vector<8x64xf32>
    %105 = arith.mulf %101, %104 : vector<8x64xf32>
    %106 = math.erf %105 : vector<8x64xf32>
    %cst_48 = arith.constant 1.000000e+00 : f32
    %107 = vector.broadcast %cst_48 : f32 to vector<8x64xf32>
    %108 = arith.addf %107, %106 : vector<8x64xf32>
    %109 = arith.mulf %103, %108 : vector<8x64xf32>
    %110 = arith.truncf %109 : vector<8x64xf32> to vector<8x64xbf16>
    %cst_49 = arith.constant dense<0.000000e+00> : vector<8x32xf32>
    %111 = tpu.matmul %110, %9, %cst_49 {dimension_numbers = #tpu.dot_dimension_numbers<[1], [0], [0], [1], [0, 0, 1, 1], [], []>} : vector<8x64xbf16>, vector<64x32xbf16>, vector<8x32xf32> -> vector<8x32xf32>
    %112 = vector.broadcast %10 : vector<1x32xf32> to vector<8x32xf32>
    %113 = arith.addf %111, %112 : vector<8x32xf32>
    %114 = arith.addf %75, %113 : vector<8x32xf32>
    %c0_50 = arith.constant 0 : index
    %c0_51 = arith.constant 0 : index
    %c0_52 = arith.constant 0 : index
    %115 = vector.load %arg13[%c0_50, %c0_51, %c0_52] : memref<1x8x32xf32, #tpu.memory_space<vmem>>, vector<1x8x32xf32>
    %116 = vector.shape_cast %115 : vector<1x8x32xf32> to vector<8x32xf32>
    %117 = vector.shape_cast %114 : vector<8x32xf32> to vector<1x8x32xf32>
    tpu.vector_store %arg13[%c0_50, %c0_51, %c0_52], %117 {strides = array<i32>} : memref<1x8x32xf32, #tpu.memory_space<vmem>>, vector<1x8x32xf32>,
    return
  }
  func.func @transform_0(%arg0: i32) -> (i32, i32, i32) {
    %c0_i32 = arith.constant 0 : i32
    %c0_i32_0 = arith.constant 0 : i32
    %c0_i32_1 = arith.constant 0 : i32
    return %arg0, %c0_i32, %c0_i32_0 : i32, i32, i32
  }
  func.func @transform_1(%arg0: i32) -> (i32, i32) {
    %c0_i32 = arith.constant 0 : i32
    %c0_i32_0 = arith.constant 0 : i32
    %c0_i32_1 = arith.constant 0 : i32
    return %c0_i32, %c0_i32_0 : i32, i32
  }
  func.func @transform_2(%arg0: i32) -> (i32, i32) {
    %c0_i32 = arith.constant 0 : i32
    %c0_i32_0 = arith.constant 0 : i32
    %c0_i32_1 = arith.constant 0 : i32
    return %c0_i32, %c0_i32_0 : i32, i32
  }
  func.func @transform_3(%arg0: i32) -> (i32, i32) {
    %c0_i32 = arith.constant 0 : i32
    %c0_i32_0 = arith.constant 0 : i32
    %c0_i32_1 = arith.constant 0 : i32
    return %c0_i32, %c0_i32_0 : i32, i32
  }
  func.func @transform_4(%arg0: i32) -> (i32, i32) {
    %c0_i32 = arith.constant 0 : i32
    %c0_i32_0 = arith.constant 0 : i32
    %c0_i32_1 = arith.constant 0 : i32
    return %c0_i32, %c0_i32_0 : i32, i32
  }
  func.func @transform_5(%arg0: i32) -> (i32, i32) {
    %c0_i32 = arith.constant 0 : i32
    %c0_i32_0 = arith.constant 0 : i32
    %c0_i32_1 = arith.constant 0 : i32
    return %c0_i32, %c0_i32_0 : i32, i32
  }
  func.func @transform_6(%arg0: i32) -> (i32, i32) {
    %c0_i32 = arith.constant 0 : i32
    %c0_i32_0 = arith.constant 0 : i32
    %c0_i32_1 = arith.constant 0 : i32
    return %c0_i32, %c0_i32_0 : i32, i32
  }
  func.func @transform_7(%arg0: i32) -> (i32, i32) {
    %c0_i32 = arith.constant 0 : i32
    %c0_i32_0 = arith.constant 0 : i32
    %c0_i32_1 = arith.constant 0 : i32
    return %c0_i32, %c0_i32_0 : i32, i32
  }
  func.func @transform_8(%arg0: i32) -> (i32, i32) {
    %c0_i32 = arith.constant 0 : i32
    %c0_i32_0 = arith.constant 0 : i32
    %c0_i32_1 = arith.constant 0 : i32
    return %c0_i32, %c0_i32_0 : i32, i32
  }
  func.func @transform_9(%arg0: i32) -> (i32, i32) {
    %c0_i32 = arith.constant 0 : i32
    %c0_i32_0 = arith.constant 0 : i32
    %c0_i32_1 = arith.constant 0 : i32
    return %c0_i32, %c0_i32_0 : i32, i32
  }
  func.func @transform_10(%arg0: i32) -> (i32, i32) {
    %c0_i32 = arith.constant 0 : i32
    %c0_i32_0 = arith.constant 0 : i32
    %c0_i32_1 = arith.constant 0 : i32
    return %c0_i32, %c0_i32_0 : i32, i32
  }
  func.func @transform_11(%arg0: i32) -> (i32, i32) {
    %c0_i32 = arith.constant 0 : i32
    %c0_i32_0 = arith.constant 0 : i32
    %c0_i32_1 = arith.constant 0 : i32
    return %c0_i32, %c0_i32_0 : i32, i32
  }
  func.func @transform_12(%arg0: i32) -> (i32, i32, i32) {
    %c0_i32 = arith.constant 0 : i32
    %c0_i32_0 = arith.constant 0 : i32
    %c0_i32_1 = arith.constant 0 : i32
    return %arg0, %c0_i32, %c0_i32_0 : i32, i32, i32
  }
  func.func @transform_13(%arg0: i32) -> (i32, i32, i32, i32) {
    %c0_i32 = arith.constant 0 : i32
    %c0_i32_0 = arith.constant 0 : i32
    %c0_i32_1 = arith.constant 0 : i32
    %c0_i32_2 = arith.constant 0 : i32
    return %arg0, %c0_i32, %c0_i32_0, %c0_i32_1 : i32, i32, i32, i32
  }
}

</mosaic_0001>

<llo_original>
// kernel: transformer_forward.2
$region0: #{transformer_forward.2}
  #allocation0 [shape = 'u32[]', space=smem, size = 0x4, offset = 0x4, fixed_abs, tag = 'smem constant byte address 0x4 - core index']
  #allocation1 [shape = 'u32[72,128]{1,0:T(1,128)}', space=vmem, size = 0x9000, scoped, tag = 'internal scratch']
  %s0 = inlined_call_operand.vmem [shape: f32[2,8,32], index: 0, kind: input, shape index: {}, may-alias: {0,12}]
  %s1 = inlined_call_operand.vmem [shape: f32[1,32], index: 1, kind: input, shape index: {}]
  %s2 = inlined_call_operand.vmem [shape: f32[1,32], index: 2, kind: input, shape index: {}]
  %s3 = inlined_call_operand.vmem [shape: bf16[32,96], index: 3, kind: input, shape index: {}]
  %s4 = inlined_call_operand.vmem [shape: bf16[32,32], index: 4, kind: input, shape index: {}]
  %s5 = inlined_call_operand.vmem [shape: f32[1,32], index: 5, kind: input, shape index: {}]
  %s6 = inlined_call_operand.vmem [shape: f32[1,32], index: 6, kind: input, shape index: {}]
  %s7 = inlined_call_operand.vmem [shape: f32[1,32], index: 7, kind: input, shape index: {}]
  %s8 = inlined_call_operand.vmem [shape: bf16[32,64], index: 8, kind: input, shape index: {}]
  %s9 = inlined_call_operand.vmem [shape: f32[1,64], index: 9, kind: input, shape index: {}]
  %s10 = inlined_call_operand.vmem [shape: bf16[64,32], index: 10, kind: input, shape index: {}]
  %s11 = inlined_call_operand.vmem [shape: f32[1,32], index: 11, kind: input, shape index: {}]
  %s12 = inlined_call_operand.vmem [shape: f32[2,8,32], index: 12, kind: output, shape index: {0}, may-alias: {0,12}]
  %s13 = inlined_call_operand.hbm [shape: f32[2,4,8,128], index: 13, kind: output, shape index: {1}]
  %14 = xla_tuple %s12, %s13
  %s15 = sld [smem:[#allocation0]]
  $region89: #{transformer_forward.2} parent=0
    _
  %s17 = ssub.s32 1, %s15
  %s18 = scalar_select 0, %s17, %s15
  $region1: #{transformer_forward.2} parent=0
    #allocation2 [shape = 'u8[32768]{0}', space=vmem, size = 0x8000, scoped, tag = 'output window, operand 1']
    #allocation3 [shape = 's32[2]{0}', space=sflag, size = 0x8, scoped, tag = 'scoped memory for transformer_forward.2']
    %19 = vsyncpa [#allocation3], 0
    %s20 = scalar_lea.sflag [#allocation3], 1
    %21 = vsyncpa %s20, 0
    loop: start=0, step=1, limit=4
    $region2: #{transformer_forward.2} parent=1 // loop_pre_header
      _
    $region3: #{transformer_forward.2} parent=1 // loop_header
      %s23 = sphi 0, %s27
      %p24 = scmp.ge.s32.totalorder %s23, 4
      %s33 = sphi 0, %s35
      %s36 = sphi 0, %s33
      %s37 = sphi 0, %s36
      %s53 = sphi 0, %s37
      %s57 = sphi 0, %s57
      %s59 = sphi 0, %s57
      %s60 = sphi 0, %s59
      %s74 = sphi 0, %s60
      %s78 = sphi 0, %s78
      %s80 = sphi 0, %s78
      %s81 = sphi 0, %s80
      %s95 = sphi 0, %s81
      %s99 = sphi 0, %s99
      %s101 = sphi 0, %s99
      %s102 = sphi 0, %s101
      %s116 = sphi 0, %s102
      %s120 = sphi 0, %s120
      %s122 = sphi 0, %s120
      %s123 = sphi 0, %s122
      %s137 = sphi 0, %s123
      %s141 = sphi 0, %s141
      %s143 = sphi 0, %s141
      %s144 = sphi 0, %s143
      %s158 = sphi 0, %s144
      %s162 = sphi 0, %s162
      %s164 = sphi 0, %s162
      %s165 = sphi 0, %s164
      %s179 = sphi 0, %s165
      %s183 = sphi 0, %s183
      %s185 = sphi 0, %s183
      %s186 = sphi 0, %s185
      %s200 = sphi 0, %s186
      %s204 = sphi 0, %s204
      %s206 = sphi 0, %s204
      %s207 = sphi 0, %s206
      %s221 = sphi 0, %s207
      %s225 = sphi 0, %s225
      %s227 = sphi 0, %s225
      %s228 = sphi 0, %s227
      %s242 = sphi 0, %s228
      %s246 = sphi 0, %s246
      %s248 = sphi 0, %s246
      %s249 = sphi 0, %s248
      %s263 = sphi 0, %s249
      %s267 = sphi 0, %s267
      %s269 = sphi 0, %s267
      %s270 = sphi 0, %s269
      %s284 = sphi 0, %s270
      %s290 = sphi 0, %s292
      %s293 = sphi 0, %s290
      %s294 = sphi 0, %s293
      %s310 = sphi 0, %s294
      %s316 = sphi 0, %s318
      %s319 = sphi 0, %s316
      %s320 = sphi 0, %s319
      %s336 = sphi 0, %s320
    $region4: #{transformer_forward.2} parent=1 // loop_header_branch
      %26 = sbr.rel (%p24) target = $region8
    $region5: #{transformer_forward.2} parent=1 // loop_body
      %s28 = ssub.s32 %s23, 1
      %s29 = ssub.s32 %s23, 2
      %s30 = sadd.s32 %s23, 1
      %s31 = ssub.s32 %s23, %s30
      %p32 = scmp.eq.s32.totalorder %s31, 0
      %s34 = sadd.s32 %s33, 1
      %s35 = scalar_select %p32, %s33, %s34
      %p38 = pneg %p32
      %p39 = scmp.eq.s32.totalorder %s23, 1
      %p40 = por %p38, %p39
      %p41 = scmp.ne.s32.totalorder %s33, %s36
      %p42 = scmp.eq.s32.totalorder %s23, 0
      %p43 = por %p41, %p42
      %p44 = scmp.ne.s32.totalorder %s33, %s36
      %p45 = scmp.eq.s32.totalorder %s28, 1
      %p46 = por %p44, %p45
      %p47 = scmp.ne.s32.totalorder %s36, %s37
      %p48 = scmp.eq.s32.totalorder %s28, 0
      %p49 = por %p47, %p48
      %p50 = scmp.ne.s32.totalorder %s36, %s37
      %p51 = scmp.eq.s32.totalorder %s29, 1
      %p52 = por %p50, %p51
      %p54 = scmp.ne.s32.totalorder %s37, %s53
      %p55 = scmp.eq.s32.totalorder %s29, 0
      %p56 = por %p54, %p55
      %s58 = sadd.s32 %s57, 1
      %p61 = scmp.eq.s32.totalorder %s23, 1
      %p62 = scmp.ne.s32.totalorder %s57, %s59
      %p63 = scmp.eq.s32.totalorder %s23, 0
      %p64 = por %p62, %p63
      %p65 = scmp.ne.s32.totalorder %s57, %s59
      %p66 = scmp.eq.s32.totalorder %s28, 1
      %p67 = por %p65, %p66
      %p68 = scmp.ne.s32.totalorder %s59, %s60
      %p69 = scmp.eq.s32.totalorder %s28, 0
      %p70 = por %p68, %p69
      %p71 = scmp.ne.s32.totalorder %s59, %s60
      %p72 = scmp.eq.s32.totalorder %s29, 1
      %p73 = por %p71, %p72
      %p75 = scmp.ne.s32.totalorder %s60, %s74
      %p76 = scmp.eq.s32.totalorder %s29, 0
      %p77 = por %p75, %p76
      %s79 = sadd.s32 %s78, 1
      %p82 = scmp.eq.s32.totalorder %s23, 1
      %p83 = scmp.ne.s32.totalorder %s78, %s80
      %p84 = scmp.eq.s32.totalorder %s23, 0
      %p85 = por %p83, %p84
      %p86 = scmp.ne.s32.totalorder %s78, %s80
      %p87 = scmp.eq.s32.totalorder %s28, 1
      %p88 = por %p86, %p87
      %p89 = scmp.ne.s32.totalorder %s80, %s81
      %p90 = scmp.eq.s32.totalorder %s28, 0
      %p91 = por %p89, %p90
      %p92 = scmp.ne.s32.totalorder %s80, %s81
      %p93 = scmp.eq.s32.totalorder %s29, 1
      %p94 = por %p92, %p93
      %p96 = scmp.ne.s32.totalorder %s81, %s95
      %p97 = scmp.eq.s32.totalorder %s29, 0
      %p98 = por %p96, %p97
      %s100 = sadd.s32 %s99, 1
      %p103 = scmp.eq.s32.totalorder %s23, 1
      %p104 = scmp.ne.s32.totalorder %s99, %s101
      %p105 = scmp.eq.s32.totalorder %s23, 0
      %p106 = por %p104, %p105
      %p107 = scmp.ne.s32.totalorder %s99, %s101
      %p108 = scmp.eq.s32.totalorder %s28, 1
      %p109 = por %p107, %p108
      %p110 = scmp.ne.s32.totalorder %s101, %s102
      %p111 = scmp.eq.s32.totalorder %s28, 0
      %p112 = por %p110, %p111
      %p113 = scmp.ne.s32.totalorder %s101, %s102
      %p114 = scmp.eq.s32.totalorder %s29, 1
      %p115 = por %p113, %p114
      %p117 = scmp.ne.s32.totalorder %s102, %s116
      %p118 = scmp.eq.s32.totalorder %s29, 0
      %p119 = por %p117, %p118
      %s121 = sadd.s32 %s120, 1
      %p124 = scmp.eq.s32.totalorder %s23, 1
      %p125 = scmp.ne.s32.totalorder %s120, %s122
      %p126 = scmp.eq.s32.totalorder %s23, 0
      %p127 = por %p125, %p126
      %p128 = scmp.ne.s32.totalorder %s120, %s122
      %p129 = scmp.eq.s32.totalorder %s28, 1
      %p130 = por %p128, %p129
      %p131 = scmp.ne.s32.totalorder %s122, %s123
      %p132 = scmp.eq.s32.totalorder %s28, 0
      %p133 = por %p131, %p132
      %p134 = scmp.ne.s32.totalorder %s122, %s123
      %p135 = scmp.eq.s32.totalorder %s29, 1
      %p136 = por %p134, %p135
      %p138 = scmp.ne.s32.totalorder %s123, %s137
      %p139 = scmp.eq.s32.totalorder %s29, 0
      %p140 = por %p138, %p139
      %s142 = sadd.s32 %s141, 1
      %p145 = scmp.eq.s32.totalorder %s23, 1
      %p146 = scmp.ne.s32.totalorder %s141, %s143
      %p147 = scmp.eq.s32.totalorder %s23, 0
      %p148 = por %p146, %p147
      %p149 = scmp.ne.s32.totalorder %s141, %s143
      %p150 = scmp.eq.s32.totalorder %s28, 1
      %p151 = por %p149, %p150
      %p152 = scmp.ne.s32.totalorder %s143, %s144
      %p153 = scmp.eq.s32.totalorder %s28, 0
      %p154 = por %p152, %p153
      %p155 = scmp.ne.s32.totalorder %s143, %s144
      %p156 = scmp.eq.s32.totalorder %s29, 1
      %p157 = por %p155, %p156
      %p159 = scmp.ne.s32.totalorder %s144, %s158
      %p160 = scmp.eq.s32.totalorder %s29, 0
      %p161 = por %p159, %p160
      %s163 = sadd.s32 %s162, 1
      %p166 = scmp.eq.s32.totalorder %s23, 1
      %p167 = scmp.ne.s32.totalorder %s162, %s164
      %p168 = scmp.eq.s32.totalorder %s23, 0
      %p169 = por %p167, %p168
      %p170 = scmp.ne.s32.totalorder %s162, %s164
      %p171 = scmp.eq.s32.totalorder %s28, 1
      %p172 = por %p170, %p171
      %p173 = scmp.ne.s32.totalorder %s164, %s165
      %p174 = scmp.eq.s32.totalorder %s28, 0
      %p175 = por %p173, %p174
      %p176 = scmp.ne.s32.totalorder %s164, %s165
      %p177 = scmp.eq.s32.totalorder %s29, 1
      %p178 = por %p176, %p177
      %p180 = scmp.ne.s32.totalorder %s165, %s179
      %p181 = scmp.eq.s32.totalorder %s29, 0
      %p182 = por %p180, %p181
      %s184 = sadd.s32 %s183, 1
      %p187 = scmp.eq.s32.totalorder %s23, 1
      %p188 = scmp.ne.s32.totalorder %s183, %s185
      %p189 = scmp.eq.s32.totalorder %s23, 0
      %p190 = por %p188, %p189
      %p191 = scmp.ne.s32.totalorder %s183, %s185
      %p192 = scmp.eq.s32.totalorder %s28, 1
      %p193 = por %p191, %p192
      %p194 = scmp.ne.s32.totalorder %s185, %s186
      %p195 = scmp.eq.s32.totalorder %s28, 0
      %p196 = por %p194, %p195
      %p197 = scmp.ne.s32.totalorder %s185, %s186
      %p198 = scmp.eq.s32.totalorder %s29, 1
      %p199 = por %p197, %p198
      %p201 = scmp.ne.s32.totalorder %s186, %s200
      %p202 = scmp.eq.s32.totalorder %s29, 0
      %p203 = por %p201, %p202
      %s205 = sadd.s32 %s204, 1
      %p208 = scmp.eq.s32.totalorder %s23, 1
      %p209 = scmp.ne.s32.totalorder %s204, %s206
      %p210 = scmp.eq.s32.totalorder %s23, 0
      %p211 = por %p209, %p210
      %p212 = scmp.ne.s32.totalorder %s204, %s206
      %p213 = scmp.eq.s32.totalorder %s28, 1
      %p214 = por %p212, %p213
      %p215 = scmp.ne.s32.totalorder %s206, %s207
      %p216 = scmp.eq.s32.totalorder %s28, 0
      %p217 = por %p215, %p216
      %p218 = scmp.ne.s32.totalorder %s206, %s207
      %p219 = scmp.eq.s32.totalorder %s29, 1
      %p220 = por %p218, %p219
      %p222 = scmp.ne.s32.totalorder %s207, %s221
      %p223 = scmp.eq.s32.totalorder %s29, 0
      %p224 = por %p222, %p223
      %s226 = sadd.s32 %s225, 1
      %p229 = scmp.eq.s32.totalorder %s23, 1
      %p230 = scmp.ne.s32.totalorder %s225, %s227
      %p231 = scmp.eq.s32.totalorder %s23, 0
      %p232 = por %p230, %p231
      %p233 = scmp.ne.s32.totalorder %s225, %s227
      %p234 = scmp.eq.s32.totalorder %s28, 1
      %p235 = por %p233, %p234
      %p236 = scmp.ne.s32.totalorder %s227, %s228
      %p237 = scmp.eq.s32.totalorder %s28, 0
      %p238 = por %p236, %p237
      %p239 = scmp.ne.s32.totalorder %s227, %s228
      %p240 = scmp.eq.s32.totalorder %s29, 1
      %p241 = por %p239, %p240
      %p243 = scmp.ne.s32.totalorder %s228, %s242
      %p244 = scmp.eq.s32.totalorder %s29, 0
      %p245 = por %p243, %p244
      %s247 = sadd.s32 %s246, 1
      %p250 = scmp.eq.s32.totalorder %s23, 1
      %p251 = scmp.ne.s32.totalorder %s246, %s248
      %p252 = scmp.eq.s32.totalorder %s23, 0
      %p253 = por %p251, %p252
      %p254 = scmp.ne.s32.totalorder %s246, %s248
      %p255 = scmp.eq.s32.totalorder %s28, 1
      %p256 = por %p254, %p255
      %p257 = scmp.ne.s32.totalorder %s248, %s249
      %p258 = scmp.eq.s32.totalorder %s28, 0
      %p259 = por %p257, %p258
      %p260 = scmp.ne.s32.totalorder %s248, %s249
      %p261 = scmp.eq.s32.totalorder %s29, 1
      %p262 = por %p260, %p261
      %p264 = scmp.ne.s32.totalorder %s249, %s263
      %p265 = scmp.eq.s32.totalorder %s29, 0
      %p266 = por %p264, %p265
      %s268 = sadd.s32 %s267, 1
      %p271 = scmp.eq.s32.totalorder %s23, 1
      %p272 = scmp.ne.s32.totalorder %s267, %s269
      %p273 = scmp.eq.s32.totalorder %s23, 0
      %p274 = por %p272, %p273
      %p275 = scmp.ne.s32.totalorder %s267, %s269
      %p276 = scmp.eq.s32.totalorder %s28, 1
      %p277 = por %p275, %p276
      %p278 = scmp.ne.s32.totalorder %s269, %s270
      %p279 = scmp.eq.s32.totalorder %s28, 0
      %p280 = por %p278, %p279
      %p281 = scmp.ne.s32.totalorder %s269, %s270
      %p282 = scmp.eq.s32.totalorder %s29, 1
      %p283 = por %p281, %p282
      %p285 = scmp.ne.s32.totalorder %s270, %s284
      %p286 = scmp.eq.s32.totalorder %s29, 0
      %p287 = por %p285, %p286
      %s288 = ssub.s32 %s23, %s30
      %p289 = scmp.eq.s32.totalorder %s288, 0
      %s291 = sadd.s32 %s290, 1
      %s292 = scalar_select %p289, %s290, %s291
      %p295 = pneg %p289
      %p296 = scmp.eq.s32.totalorder %s23, 1
      %p297 = por %p295, %p296
      %p298 = scmp.ne.s32.totalorder %s290, %s293
      %p299 = scmp.eq.s32.totalorder %s23, 0
      %p300 = por %p298, %p299
      %p301 = scmp.ne.s32.totalorder %s290, %s293
      %p302 = scmp.eq.s32.totalorder %s28, 1
      %p303 = por %p301, %p302
      %p304 = scmp.ne.s32.totalorder %s293, %s294
      %p305 = scmp.eq.s32.totalorder %s28, 0
      %p306 = por %p304, %p305
      %p307 = scmp.ne.s32.totalorder %s293, %s294
      %p308 = scmp.eq.s32.totalorder %s29, 1
      %p309 = por %p307, %p308
      %p311 = scmp.ne.s32.totalorder %s294, %s310
      %p312 = scmp.eq.s32.totalorder %s29, 0
      %p313 = por %p311, %p312
      %s314 = ssub.s32 %s23, %s30
      %p315 = scmp.eq.s32.totalorder %s314, 0
      %s317 = sadd.s32 %s316, 1
      %s318 = scalar_select %p315, %s316, %s317
      %p321 = pneg %p315
      %p322 = scmp.eq.s32.totalorder %s23, 1
      %p323 = por %p321, %p322
      %p324 = scmp.ne.s32.totalorder %s316, %s319
      %p325 = scmp.eq.s32.totalorder %s23, 0
      %p326 = por %p324, %p325
      %p327 = scmp.ne.s32.totalorder %s316, %s319
      %p328 = scmp.eq.s32.totalorder %s28, 1
      %p329 = por %p327, %p328
      %p330 = scmp.ne.s32.totalorder %s319, %s320
      %p331 = scmp.eq.s32.totalorder %s28, 0
      %p332 = por %p330, %p331
      %p333 = scmp.ne.s32.totalorder %s319, %s320
      %p334 = scmp.eq.s32.totalorder %s29, 1
      %p335 = por %p333, %p334
      %p337 = scmp.ne.s32.totalorder %s320, %s336
      %p338 = scmp.eq.s32.totalorder %s29, 0
      %p339 = por %p337, %p338
      %p340 = scmp.le.s32.totalorder 1, %s23
      %p341 = scmp.lt.s32.totalorder %s23, 3
      %p342 = pnand %p340, %p341
      %p343 = pneg %p342
      // Predicated region
      $region9: #{transformer_forward.2} parent=5 // pred_check
        _
      $region10: #{transformer_forward.2} parent=5 // pred_check_branch
        %345 = sbr.rel (%p342) target = $region12
      $region11: #{transformer_forward.2} parent=5 // pred_region
        %s346 = ssub.s32 %s23, 1
        // Predicated region
        $region13: #{transformer_forward.2} parent=11 // pred_check
          %p347 = pneg %p70
        $region14: #{transformer_forward.2} parent=11 // pred_check_branch
          %349 = sbr.rel (%p347) target = $region16
        $region15: #{transformer_forward.2} parent=11 // pred_region
          _
        $region16: #{transformer_forward.2} parent=11 // pred_fallthru
          _
        // Predicated region
        $region17: #{transformer_forward.2} parent=11 // pred_check
          %p350 = pneg %p91
        $region18: #{transformer_forward.2} parent=11 // pred_check_branch
          %352 = sbr.rel (%p350) target = $region20
        $region19: #{transformer_forward.2} parent=11 // pred_region
          _
        $region20: #{transformer_forward.2} parent=11 // pred_fallthru
          _
        // Predicated region
        $region21: #{transformer_forward.2} parent=11 // pred_check
          %p353 = pneg %p112
        $region22: #{transformer_forward.2} parent=11 // pred_check_branch
          %355 = sbr.rel (%p353) target = $region24
        $region23: #{transformer_forward.2} parent=11 // pred_region
          _
        $region24: #{transformer_forward.2} parent=11 // pred_fallthru
          _
        // Predicated region
        $region25: #{transformer_forward.2} parent=11 // pred_check
          %p356 = pneg %p133
        $region26: #{transformer_forward.2} parent=11 // pred_check_branch
          %358 = sbr.rel (%p356) target = $region28
        $region27: #{transformer_forward.2} parent=11 // pred_region
          _
        $region28: #{transformer_forward.2} parent=11 // pred_fallthru
          _
        // Predicated region
        $region29: #{transformer_forward.2} parent=11 // pred_check
          %p359 = pneg %p154
        $region30: #{transformer_forward.2} parent=11 // pred_check_branch
          %361 = sbr.rel (%p359) target = $region32
        $region31: #{transformer_forward.2} parent=11 // pred_region
          _
        $region32: #{transformer_forward.2} parent=11 // pred_fallthru
          _
        // Predicated region
        $region33: #{transformer_forward.2} parent=11 // pred_check
          %p362 = pneg %p175
        $region34: #{transformer_forward.2} parent=11 // pred_check_branch
          %364 = sbr.rel (%p362) target = $region36
        $region35: #{transformer_forward.2} parent=11 // pred_region
          _
        $region36: #{transformer_forward.2} parent=11 // pred_fallthru
          _
        // Predicated region
        $region37: #{transformer_forward.2} parent=11 // pred_check
          %p365 = pneg %p196
        $region38: #{transformer_forward.2} parent=11 // pred_check_branch
          %367 = sbr.rel (%p365) target = $region40
        $region39: #{transformer_forward.2} parent=11 // pred_region
          _
        $region40: #{transformer_forward.2} parent=11 // pred_fallthru
          _
        // Predicated region
        $region41: #{transformer_forward.2} parent=11 // pred_check
          %p368 = pneg %p217
        $region42: #{transformer_forward.2} parent=11 // pred_check_branch
          %370 = sbr.rel (%p368) target = $region44
        $region43: #{transformer_forward.2} parent=11 // pred_region
          _
        $region44: #{transformer_forward.2} parent=11 // pred_fallthru
          _
        // Predicated region
        $region45: #{transformer_forward.2} parent=11 // pred_check
          %p371 = pneg %p238
        $region46: #{transformer_forward.2} parent=11 // pred_check_branch
          %373 = sbr.rel (%p371) target = $region48
        $region47: #{transformer_forward.2} parent=11 // pred_region
          _
        $region48: #{transformer_forward.2} parent=11 // pred_fallthru
          _
        // Predicated region
        $region49: #{transformer_forward.2} parent=11 // pred_check
          %p374 = pneg %p259
        $region50: #{transformer_forward.2} parent=11 // pred_check_branch
          %376 = sbr.rel (%p374) target = $region52
        $region51: #{transformer_forward.2} parent=11 // pred_region
          _
        $region52: #{transformer_forward.2} parent=11 // pred_fallthru
          _
        // Predicated region
        $region53: #{transformer_forward.2} parent=11 // pred_check
          %p377 = pneg %p280
        $region54: #{transformer_forward.2} parent=11 // pred_check_branch
          %379 = sbr.rel (%p377) target = $region56
        $region55: #{transformer_forward.2} parent=11 // pred_region
          _
        $region56: #{transformer_forward.2} parent=11 // pred_fallthru
          _
      $region12: #{transformer_forward.2} parent=5 // pred_fallthru
        _
      %p380 = scmp.lt.s32.totalorder %s23, 2
      // Predicated region
      $region57: #{transformer_forward.2} parent=5 // pred_check
        %p381 = pneg %p380
      $region58: #{transformer_forward.2} parent=5 // pred_check_branch
        %383 = sbr.rel (%p381) target = $region60
      $region59: #{transformer_forward.2} parent=5 // pred_region
        // Predicated region
        $region61: #{transformer_forward.2} parent=59 // pred_check
          %p384 = pneg %p43
        $region62: #{transformer_forward.2} parent=59 // pred_check_branch
          %386 = sbr.rel (%p384) target = $region64
        $region63: #{transformer_forward.2} parent=59 // pred_region
          %p387 = scmp.lt.s32.totalorder %s23, 1
          %s388 = scalar_select %p387, %s23, 1
          %s389 = smul.addr %s388, 8
          %s390 = scalar_lea.vmem %s0, %s389
        $region64: #{transformer_forward.2} parent=59 // pred_fallthru
          _
      $region60: #{transformer_forward.2} parent=5 // pred_fallthru
        _
      %p391 = scmp.le.s32.totalorder 1, %s23
      %p392 = scmp.lt.s32.totalorder %s23, 3
      %p393 = pnand %p391, %p392
      %p394 = pneg %p393
      // Predicated region
      $region65: #{transformer_forward.2} parent=5 // pred_check
        _
      $region66: #{transformer_forward.2} parent=5 // pred_check_branch
        %396 = sbr.rel (%p393) target = $region68
      $region67: #{transformer_forward.2} parent=5 // pred_region
        %s397 = ssub.s32 %s23, 1
        %p398 = scmp.lt.s32.totalorder %s28, 1
        %s399 = scalar_select %p398, %s28, 1
        %s400 = smul.addr %s399, 8
        %s401 = scalar_lea.vmem %s0, %s400
        %p402 = pneg %p49
        %p403 = pneg %p46
        %p404 = pneg %p70
        %p405 = pneg %p67
        %p406 = pneg %p91
        %p407 = pneg %p88
        %p408 = pneg %p112
        %p409 = pneg %p109
        %p410 = pneg %p133
        %p411 = pneg %p130
        %p412 = pneg %p154
        %p413 = pneg %p151
        %p414 = pneg %p175
        %p415 = pneg %p172
        %p416 = pneg %p196
        %p417 = pneg %p193
        %p418 = pneg %p217
        %p419 = pneg %p214
        %p420 = pneg %p238
        %p421 = pneg %p235
        %p422 = pneg %p259
        %p423 = pneg %p256
        %p424 = pneg %p280
        %p425 = pneg %p277
        %p426 = pneg %p306
        %p427 = pneg %p303
        %p428 = scmp.lt.s32.totalorder %s28, 1
        %s429 = scalar_select %p428, %s28, 1
        %s430 = smul.addr %s429, 8
        %s431 = scalar_lea.vmem %s12, %s430
        %p432 = pneg %p332
        %p433 = pneg %p329
        %s434 = sand.u32 %s319, 1
        %s435 = scalar_lea.sflag [#allocation3], %s434
        %s436 = sand.u32 %s319, 1
        %s437 = smul.addr %s436, 32
        %s438 = scalar_lea.vmem [#allocation2], %s437
        %p439 = scmp.lt.s32.totalorder %s28, 1
        %s440 = scalar_select %p439, %s28, 1
        %s441 = smul.addr %s440, 8
        %s442 = scalar_lea.vmem %s0, %s441
        %p443 = scmp.lt.s32.totalorder %s28, 1
        %s444 = scalar_select %p443, %s28, 1
        %s445 = smul.addr %s444, 8
        %s446 = scalar_lea.vmem %s12, %s445
        %v448 = vld [vmem:[%s1] sm:$0x1]
        %v449 = vld [vmem:[%s2] sm:$0x1]
        %v450 = vld [vmem:[%s6] sm:$0x1]
        %v451 = vld [vmem:[%s7] sm:$0x1]
        %v452 = vld [vmem:[%s3] sm:$0xf]
        %v453 = vld [vmem:[%s3 + $0x4] sm:$0xf]
        %v454 = vld [vmem:[%s3 + $0x8] sm:$0xf]
        %v455 = vld [vmem:[%s3 + $0xc] sm:$0xf]
        %v456 = vld [vmem:[%s4] sm:$0xf]
        %v457 = vld [vmem:[%s4 + $0x4] sm:$0xf]
        %v458 = vld [vmem:[%s4 + $0x8] sm:$0xf]
        %v459 = vld [vmem:[%s4 + $0xc] sm:$0xf]
        %v460 = vld [vmem:[%s5] sm:$0x1]
        %v461 = vld [vmem:[%s8] sm:$0xf]
        %v462 = vld [vmem:[%s8 + $0x4] sm:$0xf]
        %v463 = vld [vmem:[%s8 + $0x8] sm:$0xf]
        %v464 = vld [vmem:[%s8 + $0xc] sm:$0xf]
        %v465 = vld [vmem:[%s9] sm:$0x1]
        %v466 = vld [vmem:[%s10] sm:$0xf]
        %v467 = vld [vmem:[%s10 + $0x4] sm:$0xf]
        %v468 = vld [vmem:[%s10 + $0x8] sm:$0xf]
        %v469 = vld [vmem:[%s10 + $0xc] sm:$0xf]
        %v470 = vld [vmem:[%s10 + $0x10] sm:$0xf]
        %v471 = vld [vmem:[%s10 + $0x14] sm:$0xf]
        %v472 = vld [vmem:[%s10 + $0x18] sm:$0xf]
        %v473 = vld [vmem:[%s10 + $0x1c] sm:$0xf]
        %v474 = vld [vmem:[%s11] sm:$0x1]
        %v475 = vld [vmem:[%s442] sm:$0xff]
        %vm476 = vcmask 261120
        %v477 = vsel %vm476, %v475, 0.0
        %478 = vadd.xlane.f32.xlu0 %v477
        %v479 = vpop.xlane.xlu0 %478
        %v480 = vrcp.pop 32.0
        %v481 = vmul.f32 32.0, %v480
        %v482 = vsub.f32 1.0, %v481
        %v483 = vmul.f32 %v480, %v482
        %v484 = vadd.f32 %v480, %v483
        %vm485 = vweird.f32 %v480
        %v486 = vsel %vm485, %v480, %v484
        %v487 = vmul.f32 %v479, %v486
        %v488 = vsub.f32 %v475, %v487
        %v489 = vmul.f32 %v488, %v488
        %v490 = vsel %vm476, %v489, 0.0
        %491 = vadd.xlane.f32.xlu0 %v490
        %v492 = vpop.xlane.xlu0 %491
        %v493 = vmul.f32 %v492, %v486
        %v494 = vadd.f32 %v493, 1e-05
        %v495 = vrsqrt.pop %v494
        %v496 = vmul.f32 %v495, %v494
        %v497 = vmul.f32 %v496, %v495
        %v498 = vmul.f32 0.5, %v497
        %v499 = vsub.f32 1.5, %v498
        %v500 = vmul.f32 %v495, %v499
        %vm501 = vweird.f32 %v494
        %vm502 = vweird.f32 %v495
        %vm503 = vmor %vm501, %vm502
        %v504 = vsel %vm503, %v495, %v500
        %v505 = vmul.f32 %v488, %v504
        %v507 = vperm.slane %v448, 0
        %v509 = vmul.f32 %v505, %v507
        %v511 = vperm.slane %v449, 0
        %v513 = vadd.f32 %v509, %v511
        %v514 = vpack.c.bf16 %v513, %v513
        %v519 = vunpack.c.l.b16 %v452
        %v520 = vunpack.c.l.b16 %v453
        %v521 = vunpack.c.l.b16 %v454
        %v522 = vunpack.c.l.b16 %v455
        %v523 = vpack.c.b16 %v520, %v519
        %v524 = vpack.c.b16 %v522, %v521
        %v528 = vsel %vm476, %v514, 0
        %530 = vmatpush.bf16.msra.mxu0 0
        %531 = vmatpush.bf16.msra.mxu0 0
        %532 = vmatpush.bf16.msra.mxu0 0
        %533 = vmatpush.bf16.msra.mxu0 0
        %534 = vmatpush.bf16.msra.mxu0 0
        %535 = vmatpush.bf16.msra.mxu0 0
        %536 = vmatpush.bf16.msra.mxu0 %v524
        %537 = vmatpush.bf16.msra.mxu0 %v523
        %538 = vmatmul.bf16.gmra.mxu0 %v528
        %v539 = vpop.f32.mrf.mxu0
        %v540 = vadd.f32 0.0, %v539
        %v541 = vpop.f32.mrf.mxu0
        %542 = vdwg.mxu0
        %v543 = vmul.f32 %v540, 0.35355338
        %v544 = vpack.c.bf16 %v543, %v543
        %546 = vrot.lane.b32.xlu0 %v544, 120
        %v547 = vpop.permute.xlu0 %546
        %548 = vrot.lane.b32.xlu0 %v544, 112
        %v549 = vpop.permute.xlu0 %548
        %550 = vrot.lane.b32.xlu0 %v544, 104
        %v551 = vpop.permute.xlu0 %550
        %v554 = vpack.i.b16 %v547, %v544
        %v555 = vshrl.u32 %v544, 16
        %v556 = vshrl.u32 %v547, 16
        %v557 = vpack.i.b16 %v556, %v555
        %v560 = vpack.i.b16 %v551, %v549
        %v561 = vshrl.u32 %v549, 16
        %v562 = vshrl.u32 %v551, 16
        %v563 = vpack.i.b16 %v562, %v561
        %v566 = vunpack.c.l.s4 1983009808
        %v567 = vunpack.c.0.s8 %v566
        %v568 = vperm.slane %v554, %v567
        %v571 = vunpack.c.l.s4 1983009808
        %v572 = vunpack.c.0.s8 %v571
        %v573 = vperm.slane %v560, %v572
        %v574 = vrot.slane %v573, 4
        %vm575 = vcmask 1047556
        %v576 = vsel %vm575, %v574, %v568
        %v577 = vrot.slane %v568, 4
        %v578 = vsel %vm575, %v573, %v577
        %v580 = vunpack.c.l.s4 1934713408
        %v581 = vunpack.c.0.s8 %v580
        %v582 = vperm.slane %v576, %v581
        %v584 = vunpack.c.l.s4 1934713408
        %v585 = vunpack.c.0.s8 %v584
        %v586 = vperm.slane %v578, %v585
        %v587 = vrot.slane %v582, 4
        %v588 = vsel %vm575, 0, %v587
        %v589 = vrot.slane %v586, 4
        %v590 = vsel %vm575, 0, %v589
        %v593 = vunpack.c.l.s4 1983009808
        %v594 = vunpack.c.0.s8 %v593
        %v595 = vperm.slane %v557, %v594
        %v598 = vunpack.c.l.s4 1983009808
        %v599 = vunpack.c.0.s8 %v598
        %v600 = vperm.slane %v563, %v599
        %v601 = vrot.slane %v600, 4
        %v602 = vsel %vm575, %v601, %v595
        %v603 = vrot.slane %v595, 4
        %v604 = vsel %vm575, %v600, %v603
        %v606 = vunpack.c.l.s4 1934713408
        %v607 = vunpack.c.0.s8 %v606
        %v608 = vperm.slane %v602, %v607
        %v610 = vunpack.c.l.s4 1934713408
        %v611 = vunpack.c.0.s8 %v610
        %v612 = vperm.slane %v604, %v611
        %v613 = vrot.slane %v608, 4
        %v614 = vsel %vm575, 0, %v613
        %v615 = vrot.slane %v612, 4
        %v616 = vsel %vm575, 0, %v615
        %v617 = vsel %vm575, %v589, %v582
        %v619 = vunpack.c.l.s4 1983009808
        %v620 = vunpack.c.0.s8 %v619
        %v621 = vperm.slane %v617, %v620
        %v622 = vrot.slane %v590, 4
        %v623 = vsel %vm575, %v622, %v588
        %v625 = vunpack.c.l.s4 1983009808
        %v626 = vunpack.c.0.s8 %v625
        %v627 = vperm.slane %v623, %v626
        %v628 = vrot.slane %v627, 4
        %v629 = vsel %vm575, %v628, %v621
        %v631 = vunpack.c.l.s4 1934713408
        %v632 = vunpack.c.0.s8 %v631
        %v633 = vperm.slane %v629, %v632
        %v634 = vrot.slane %v633, 4
        %v635 = vsel %vm575, 0, %v634
        %v636 = vsel %vm575, %v615, %v608
        %v638 = vunpack.c.l.s4 1983009808
        %v639 = vunpack.c.0.s8 %v638
        %v640 = vperm.slane %v636, %v639
        %v641 = vrot.slane %v616, 4
        %v642 = vsel %vm575, %v641, %v614
        %v644 = vunpack.c.l.s4 1983009808
        %v645 = vunpack.c.0.s8 %v644
        %v646 = vperm.slane %v642, %v645
        %v647 = vrot.slane %v646, 4
        %v648 = vsel %vm575, %v647, %v640
        %v650 = vunpack.c.l.s4 1934713408
        %v651 = vunpack.c.0.s8 %v650
        %v652 = vperm.slane %v648, %v651
        %v653 = vrot.slane %v652, 4
        %v654 = vsel %vm575, 0, %v653
        %v657 = vpack.i.b16 %v652, %v633
        %v658 = vshrl.u32 %v633, 16
        %v659 = vshrl.u32 %v652, 16
        %v660 = vpack.i.b16 %v659, %v658
        %v663 = vpack.i.b16 %v654, %v635
        %v664 = vshrl.u32 %v635, 16
        %v665 = vshrl.u32 %v654, 16
        %v666 = vpack.i.b16 %v665, %v664
        %v667 = vpack.c.bf16 %v540, %v540
        %669 = vrot.lane.b32.xlu0 %v667, 120
        %v670 = vpop.permute.xlu0 %669
        %671 = vrot.lane.b32.xlu0 %v667, 112
        %v672 = vpop.permute.xlu0 %671
        %673 = vrot.lane.b32.xlu0 %v667, 104
        %v674 = vpop.permute.xlu0 %673
        %675 = vrot.lane.b32.xlu0 %v667, 96
        %v676 = vpop.permute.xlu0 %675
        %677 = vrot.lane.b32.xlu0 %v670, 96
        %v678 = vpop.permute.xlu0 %677
        %679 = vrot.lane.b32.xlu0 %v672, 96
        %v680 = vpop.permute.xlu0 %679
        %681 = vrot.lane.b32.xlu0 %v674, 96
        %v682 = vpop.permute.xlu0 %681
        %v685 = vpack.i.b16 %v678, %v676
        %v686 = vshrl.u32 %v676, 16
        %v687 = vshrl.u32 %v678, 16
        %v688 = vpack.i.b16 %v687, %v686
        %v691 = vpack.i.b16 %v682, %v680
        %v692 = vshrl.u32 %v680, 16
        %v693 = vshrl.u32 %v682, 16
        %v694 = vpack.i.b16 %v693, %v692
        %v697 = vunpack.c.l.s4 1983009808
        %v698 = vunpack.c.0.s8 %v697
        %v699 = vperm.slane %v685, %v698
        %v702 = vunpack.c.l.s4 1983009808
        %v703 = vunpack.c.0.s8 %v702
        %v704 = vperm.slane %v691, %v703
        %v705 = vrot.slane %v704, 4
        %v706 = vsel %vm575, %v705, %v699
        %v707 = vrot.slane %v699, 4
        %v708 = vsel %vm575, %v704, %v707
        %v710 = vunpack.c.l.s4 1934713408
        %v711 = vunpack.c.0.s8 %v710
        %v712 = vperm.slane %v706, %v711
        %v714 = vunpack.c.l.s4 1934713408
        %v715 = vunpack.c.0.s8 %v714
        %v716 = vperm.slane %v708, %v715
        %v717 = vrot.slane %v712, 4
        %v718 = vsel %vm575, 0, %v717
        %v719 = vrot.slane %v716, 4
        %v720 = vsel %vm575, 0, %v719
        %v723 = vunpack.c.l.s4 1983009808
        %v724 = vunpack.c.0.s8 %v723
        %v725 = vperm.slane %v688, %v724
        %v728 = vunpack.c.l.s4 1983009808
        %v729 = vunpack.c.0.s8 %v728
        %v730 = vperm.slane %v694, %v729
        %v731 = vrot.slane %v730, 4
        %v732 = vsel %vm575, %v731, %v725
        %v733 = vrot.slane %v725, 4
        %v734 = vsel %vm575, %v730, %v733
        %v736 = vunpack.c.l.s4 1934713408
        %v737 = vunpack.c.0.s8 %v736
        %v738 = vperm.slane %v732, %v737
        %v740 = vunpack.c.l.s4 1934713408
        %v741 = vunpack.c.0.s8 %v740
        %v742 = vperm.slane %v734, %v741
        %v743 = vrot.slane %v738, 4
        %v744 = vsel %vm575, 0, %v743
        %v745 = vrot.slane %v742, 4
        %v746 = vsel %vm575, 0, %v745
        %v747 = vsel %vm575, %v719, %v712
        %v749 = vunpack.c.l.s4 1983009808
        %v750 = vunpack.c.0.s8 %v749
        %v751 = vperm.slane %v747, %v750
        %v752 = vrot.slane %v720, 4
        %v753 = vsel %vm575, %v752, %v718
        %v755 = vunpack.c.l.s4 1983009808
        %v756 = vunpack.c.0.s8 %v755
        %v757 = vperm.slane %v753, %v756
        %v758 = vrot.slane %v757, 4
        %v759 = vsel %vm575, %v758, %v751
        %v761 = vunpack.c.l.s4 1934713408
        %v762 = vunpack.c.0.s8 %v761
        %v763 = vperm.slane %v759, %v762
        %v764 = vrot.slane %v763, 4
        %v765 = vsel %vm575, 0, %v764
        %v766 = vsel %vm575, %v745, %v738
        %v768 = vunpack.c.l.s4 1983009808
        %v769 = vunpack.c.0.s8 %v768
        %v770 = vperm.slane %v766, %v769
        %v771 = vrot.slane %v746, 4
        %v772 = vsel %vm575, %v771, %v744
        %v774 = vunpack.c.l.s4 1983009808
        %v775 = vunpack.c.0.s8 %v774
        %v776 = vperm.slane %v772, %v775
        %v777 = vrot.slane %v776, 4
        %v778 = vsel %vm575, %v777, %v770
        %v780 = vunpack.c.l.s4 1934713408
        %v781 = vunpack.c.0.s8 %v780
        %v782 = vperm.slane %v778, %v781
        %v783 = vrot.slane %v782, 4
        %v784 = vsel %vm575, 0, %v783
        %v787 = vpack.i.b16 %v782, %v763
        %v788 = vshrl.u32 %v763, 16
        %v789 = vshrl.u32 %v782, 16
        %v790 = vpack.i.b16 %v789, %v788
        %v793 = vpack.i.b16 %v784, %v765
        %v794 = vshrl.u32 %v765, 16
        %v795 = vshrl.u32 %v784, 16
        %v796 = vpack.i.b16 %v795, %v794
        %797 = vrot.lane.b32.xlu0 %v667, 64
        %v798 = vpop.permute.xlu0 %797
        %799 = vrot.lane.b32.xlu0 %v670, 64
        %v800 = vpop.permute.xlu0 %799
        %801 = vrot.lane.b32.xlu0 %v672, 64
        %v802 = vpop.permute.xlu0 %801
        %803 = vrot.lane.b32.xlu0 %v674, 64
        %v804 = vpop.permute.xlu0 %803
        %v807 = vpack.i.b16 %v800, %v798
        %v808 = vshrl.u32 %v798, 16
        %v809 = vshrl.u32 %v800, 16
        %v810 = vpack.i.b16 %v809, %v808
        %v813 = vpack.i.b16 %v804, %v802
        %v814 = vshrl.u32 %v802, 16
        %v815 = vshrl.u32 %v804, 16
        %v816 = vpack.i.b16 %v815, %v814
        %v819 = vunpack.c.l.s4 1983009808
        %v820 = vunpack.c.0.s8 %v819
        %v821 = vperm.slane %v807, %v820
        %v824 = vunpack.c.l.s4 1983009808
        %v825 = vunpack.c.0.s8 %v824
        %v826 = vperm.slane %v813, %v825
        %v827 = vrot.slane %v826, 4
        %v828 = vsel %vm575, %v827, %v821
        %v829 = vrot.slane %v821, 4
        %v830 = vsel %vm575, %v826, %v829
        %v832 = vunpack.c.l.s4 1934713408
        %v833 = vunpack.c.0.s8 %v832
        %v834 = vperm.slane %v828, %v833
        %v836 = vunpack.c.l.s4 1934713408
        %v837 = vunpack.c.0.s8 %v836
        %v838 = vperm.slane %v830, %v837
        %v839 = vrot.slane %v834, 4
        %v840 = vsel %vm575, 0, %v839
        %v841 = vrot.slane %v838, 4
        %v842 = vsel %vm575, 0, %v841
        %v845 = vunpack.c.l.s4 1983009808
        %v846 = vunpack.c.0.s8 %v845
        %v847 = vperm.slane %v810, %v846
        %v850 = vunpack.c.l.s4 1983009808
        %v851 = vunpack.c.0.s8 %v850
        %v852 = vperm.slane %v816, %v851
        %v853 = vrot.slane %v852, 4
        %v854 = vsel %vm575, %v853, %v847
        %v855 = vrot.slane %v847, 4
        %v856 = vsel %vm575, %v852, %v855
        %v858 = vunpack.c.l.s4 1934713408
        %v859 = vunpack.c.0.s8 %v858
        %v860 = vperm.slane %v854, %v859
        %v862 = vunpack.c.l.s4 1934713408
        %v863 = vunpack.c.0.s8 %v862
        %v864 = vperm.slane %v856, %v863
        %v865 = vrot.slane %v860, 4
        %v866 = vsel %vm575, 0, %v865
        %v867 = vrot.slane %v864, 4
        %v868 = vsel %vm575, 0, %v867
        %v869 = vsel %vm575, %v841, %v834
        %v871 = vunpack.c.l.s4 1983009808
        %v872 = vunpack.c.0.s8 %v871
        %v873 = vperm.slane %v869, %v872
        %v874 = vrot.slane %v842, 4
        %v875 = vsel %vm575, %v874, %v840
        %v877 = vunpack.c.l.s4 1983009808
        %v878 = vunpack.c.0.s8 %v877
        %v879 = vperm.slane %v875, %v878
        %v880 = vrot.slane %v879, 4
        %v881 = vsel %vm575, %v880, %v873
        %v883 = vunpack.c.l.s4 1934713408
        %v884 = vunpack.c.0.s8 %v883
        %v885 = vperm.slane %v881, %v884
        %v886 = vrot.slane %v885, 4
        %v887 = vsel %vm575, 0, %v886
        %v888 = vsel %vm575, %v867, %v860
        %v890 = vunpack.c.l.s4 1983009808
        %v891 = vunpack.c.0.s8 %v890
        %v892 = vperm.slane %v888, %v891
        %v893 = vrot.slane %v868, 4
        %v894 = vsel %vm575, %v893, %v866
        %v896 = vunpack.c.l.s4 1983009808
        %v897 = vunpack.c.0.s8 %v896
        %v898 = vperm.slane %v894, %v897
        %v899 = vrot.slane %v898, 4
        %v900 = vsel %vm575, %v899, %v892
        %v902 = vunpack.c.l.s4 1934713408
        %v903 = vunpack.c.0.s8 %v902
        %v904 = vperm.slane %v900, %v903
        %v905 = vrot.slane %v904, 4
        %v906 = vsel %vm575, 0, %v905
        %v909 = vpack.i.b16 %v904, %v885
        %v910 = vshrl.u32 %v885, 16
        %v911 = vshrl.u32 %v904, 16
        %v912 = vpack.i.b16 %v911, %v910
        %v915 = vpack.i.b16 %v906, %v887
        %v916 = vshrl.u32 %v887, 16
        %v917 = vshrl.u32 %v906, 16
        %v918 = vpack.i.b16 %v917, %v916
        %vm919 = vcmask 64512
        %v921 = vsel %vm919, %v657, 0
        %v924 = vsel %vm919, %v787, 0
        %926 = vmatpush.bf16.xpose.msra.mxu0 0
        %927 = vmatpush.bf16.xpose.msra.mxu0 0
        %928 = vmatpush.bf16.xpose.msra.mxu0 0
        %929 = vmatpush.bf16.xpose.msra.mxu0 0
        %930 = vmatpush.bf16.xpose.msra.mxu0 0
        %931 = vmatpush.bf16.xpose.msra.mxu0 0
        %932 = vmatpush.bf16.xpose.msra.mxu0 0
        %933 = vmatpush.bf16.xpose.msra.mxu0 %v924
        %934 = vmatmul.bf16.gmra.mxu0 %v921
        %v935 = vpop.f32.mrf.mxu0
        %v936 = vadd.f32 0.0, %v935
        %v937 = vpop.f32.mrf.mxu0
        %938 = vdwg.mxu0
        %v940 = vsel %vm919, %v660, 0
        %v943 = vsel %vm919, %v790, 0
        %945 = vmatpush.bf16.xpose.msra.mxu0 0
        %946 = vmatpush.bf16.xpose.msra.mxu0 0
        %947 = vmatpush.bf16.xpose.msra.mxu0 0
        %948 = vmatpush.bf16.xpose.msra.mxu0 0
        %949 = vmatpush.bf16.xpose.msra.mxu0 0
        %950 = vmatpush.bf16.xpose.msra.mxu0 0
        %951 = vmatpush.bf16.xpose.msra.mxu0 0
        %952 = vmatpush.bf16.xpose.msra.mxu0 %v943
        %953 = vmatmul.bf16.gmra.mxu0 %v940
        %v954 = vpop.f32.mrf.mxu0
        %v955 = vadd.f32 0.0, %v954
        %v956 = vpop.f32.mrf.mxu0
        %957 = vdwg.mxu0
        %v959 = vsel %vm919, %v663, 0
        %v962 = vsel %vm919, %v793, 0
        %964 = vmatpush.bf16.xpose.msra.mxu0 0
        %965 = vmatpush.bf16.xpose.msra.mxu0 0
        %966 = vmatpush.bf16.xpose.msra.mxu0 0
        %967 = vmatpush.bf16.xpose.msra.mxu0 0
        %968 = vmatpush.bf16.xpose.msra.mxu0 0
        %969 = vmatpush.bf16.xpose.msra.mxu0 0
        %970 = vmatpush.bf16.xpose.msra.mxu0 0
        %971 = vmatpush.bf16.xpose.msra.mxu0 %v962
        %972 = vmatmul.bf16.gmra.mxu0 %v959
        %v973 = vpop.f32.mrf.mxu0
        %v974 = vadd.f32 0.0, %v973
        %v975 = vpop.f32.mrf.mxu0
        %976 = vdwg.mxu0
        %v978 = vsel %vm919, %v666, 0
        %v981 = vsel %vm919, %v796, 0
        %983 = vmatpush.bf16.xpose.msra.mxu0 0
        %984 = vmatpush.bf16.xpose.msra.mxu0 0
        %985 = vmatpush.bf16.xpose.msra.mxu0 0
        %986 = vmatpush.bf16.xpose.msra.mxu0 0
        %987 = vmatpush.bf16.xpose.msra.mxu0 0
        %988 = vmatpush.bf16.xpose.msra.mxu0 0
        %989 = vmatpush.bf16.xpose.msra.mxu0 0
        %990 = vmatpush.bf16.xpose.msra.mxu0 %v981
        %991 = vmatmul.bf16.gmra.mxu0 %v978
        %v992 = vpop.f32.mrf.mxu0
        %v993 = vadd.f32 0.0, %v992
        %v994 = vpop.f32.mrf.mxu0
        %995 = vdwg.mxu0
        %v996 = vsel %vm919, %v936, -inf
        %997 = vmax.xlane.f32.xlu0 %v996
        %v998 = vpop.xlane.xlu0 %997
        %v999 = vsel %vm919, %v955, -inf
        %1000 = vmax.xlane.f32.xlu0 %v999
        %v1001 = vpop.xlane.xlu0 %1000
        %v1002 = vsel %vm919, %v974, -inf
        %1003 = vmax.xlane.f32.xlu0 %v1002
        %v1004 = vpop.xlane.xlu0 %1003
        %v1005 = vsel %vm919, %v993, -inf
        %1006 = vmax.xlane.f32.xlu0 %v1005
        %v1007 = vpop.xlane.xlu0 %1006
        %v1008 = vsub.f32 %v936, %v998
        %v1009 = vsub.f32 %v955, %v1001
        %v1010 = vsub.f32 %v974, %v1004
        %v1011 = vsub.f32 %v993, %v1007
        %v1012 = vmul.f32 %v1008, 1.442695
        %v1013 = vpow.pop %v1012
        %v1014 = vmul.f32 %v1009, 1.442695
        %v1015 = vpow.pop %v1014
        %v1016 = vmul.f32 %v1010, 1.442695
        %v1017 = vpow.pop %v1016
        %v1018 = vmul.f32 %v1011, 1.442695
        %v1019 = vpow.pop %v1018
        %v1020 = vsel %vm919, %v1013, 0.0
        %1021 = vadd.xlane.f32.xlu0 %v1020
        %v1022 = vpop.xlane.xlu0 %1021
        %v1023 = vsel %vm919, %v1015, 0.0
        %1024 = vadd.xlane.f32.xlu0 %v1023
        %v1025 = vpop.xlane.xlu0 %1024
        %v1026 = vsel %vm919, %v1017, 0.0
        %1027 = vadd.xlane.f32.xlu0 %v1026
        %v1028 = vpop.xlane.xlu0 %1027
        %v1029 = vsel %vm919, %v1019, 0.0
        %1030 = vadd.xlane.f32.xlu0 %v1029
        %v1031 = vpop.xlane.xlu0 %1030
        %v1032 = vrcp.pop %v1022
        %v1033 = vmul.f32 %v1022, %v1032
        %v1034 = vsub.f32 1.0, %v1033
        %v1035 = vmul.f32 %v1032, %v1034
        %v1036 = vadd.f32 %v1032, %v1035
        %vm1037 = vweird.f32 %v1022
        %vm1038 = vweird.f32 %v1032
        %vm1039 = vmor %vm1037, %vm1038
        %v1040 = vsel %vm1039, %v1032, %v1036
        %v1041 = vand.u32 2147483647, %v1022
        %vm1042 = vcmp.eq.f32.partialorder %v1041, 8.507059e+37
        %v1043 = vand.u32 %v1022, 2147483648
        %v1044 = vor.u32 1.1754944e-38, %v1043
        %v1045 = vsel %vm1042, %v1044, %v1040
        %v1046 = vrcp.pop %v1025
        %v1047 = vmul.f32 %v1025, %v1046
        %v1048 = vsub.f32 1.0, %v1047
        %v1049 = vmul.f32 %v1046, %v1048
        %v1050 = vadd.f32 %v1046, %v1049
        %vm1051 = vweird.f32 %v1025
        %vm1052 = vweird.f32 %v1046
        %vm1053 = vmor %vm1051, %vm1052
        %v1054 = vsel %vm1053, %v1046, %v1050
        %v1055 = vand.u32 2147483647, %v1025
        %vm1056 = vcmp.eq.f32.partialorder %v1055, 8.507059e+37
        %v1057 = vand.u32 %v1025, 2147483648
        %v1058 = vor.u32 1.1754944e-38, %v1057
        %v1059 = vsel %vm1056, %v1058, %v1054
        %v1060 = vrcp.pop %v1028
        %v1061 = vmul.f32 %v1028, %v1060
        %v1062 = vsub.f32 1.0, %v1061
        %v1063 = vmul.f32 %v1060, %v1062
        %v1064 = vadd.f32 %v1060, %v1063
        %vm1065 = vweird.f32 %v1028
        %vm1066 = vweird.f32 %v1060
        %vm1067 = vmor %vm1065, %vm1066
        %v1068 = vsel %vm1067, %v1060, %v1064
        %v1069 = vand.u32 2147483647, %v1028
        %vm1070 = vcmp.eq.f32.partialorder %v1069, 8.507059e+37
        %v1071 = vand.u32 %v1028, 2147483648
        %v1072 = vor.u32 1.1754944e-38, %v1071
        %v1073 = vsel %vm1070, %v1072, %v1068
        %v1074 = vrcp.pop %v1031
        %v1075 = vmul.f32 %v1031, %v1074
        %v1076 = vsub.f32 1.0, %v1075
        %v1077 = vmul.f32 %v1074, %v1076
        %v1078 = vadd.f32 %v1074, %v1077
        %vm1079 = vweird.f32 %v1031
        %vm1080 = vweird.f32 %v1074
        %vm1081 = vmor %vm1079, %vm1080
        %v1082 = vsel %vm1081, %v1074, %v1078
        %v1083 = vand.u32 2147483647, %v1031
        %vm1084 = vcmp.eq.f32.partialorder %v1083, 8.507059e+37
        %v1085 = vand.u32 %v1031, 2147483648
        %v1086 = vor.u32 1.1754944e-38, %v1085
        %v1087 = vsel %vm1084, %v1086, %v1082
        %v1088 = vmul.f32 %v1013, %v1045
        %v1089 = vmul.f32 %v1015, %v1059
        %v1090 = vmul.f32 %v1017, %v1073
        %v1091 = vmul.f32 %v1019, %v1087
        %v1092 = vsel %vm919, %v1088, 0.0
        %v1093 = vsel %vm919, %v1089, 0.0
        %v1094 = vsel %vm919, %v1090, 0.0
        %v1095 = vsel %vm919, %v1091, 0.0
        %1096 = vst [vmem:[%s438] sm:$0xff] %v1092
        %1097 = vst [vmem:[%s438 + $0x8] sm:$0xff] %v1093
        %1098 = vst [vmem:[%s438 + $0x10] sm:$0xff] %v1094
        %1099 = vst [vmem:[%s438 + $0x18] sm:$0xff] %v1095
        %v1100 = vpack.c.bf16 %v1088, %v1088
        %v1101 = vpack.c.bf16 %v1089, %v1089
        %v1102 = vpack.c.bf16 %v1090, %v1090
        %v1103 = vpack.c.bf16 %v1091, %v1091
        %v1105 = vsel %vm919, %v1100, 0
        %vm1107 = vcmask 1043456
        %v1109 = vsel %vm1107, %v909, 0
        %1111 = vmatpush.bf16.msra.mxu0 0
        %1112 = vmatpush.bf16.msra.mxu0 0
        %1113 = vmatpush.bf16.msra.mxu0 0
        %1114 = vmatpush.bf16.msra.mxu0 0
        %1115 = vmatpush.bf16.msra.mxu0 0
        %1116 = vmatpush.bf16.msra.mxu0 0
        %1117 = vmatpush.bf16.msra.mxu0 0
        %1118 = vmatpush.bf16.msra.mxu0 %v1109
        %1119 = vmatmul.bf16.gmra.mxu0 %v1105
        %v1120 = vpop.f32.mrf.mxu0
        %v1121 = vadd.f32 0.0, %v1120
        %v1122 = vpop.f32.mrf.mxu0
        %1123 = vdwg.mxu0
        %v1125 = vsel %vm919, %v1101, 0
        %v1128 = vsel %vm1107, %v912, 0
        %1130 = vmatpush.bf16.msra.mxu0 0
        %1131 = vmatpush.bf16.msra.mxu0 0
        %1132 = vmatpush.bf16.msra.mxu0 0
        %1133 = vmatpush.bf16.msra.mxu0 0
        %1134 = vmatpush.bf16.msra.mxu0 0
        %1135 = vmatpush.bf16.msra.mxu0 0
        %1136 = vmatpush.bf16.msra.mxu0 0
        %1137 = vmatpush.bf16.msra.mxu0 %v1128
        %1138 = vmatmul.bf16.gmra.mxu0 %v1125
        %v1139 = vpop.f32.mrf.mxu0
        %v1140 = vadd.f32 0.0, %v1139
        %v1141 = vpop.f32.mrf.mxu0
        %1142 = vdwg.mxu0
        %v1144 = vsel %vm919, %v1102, 0
        %v1147 = vsel %vm1107, %v915, 0
        %1149 = vmatpush.bf16.msra.mxu0 0
        %1150 = vmatpush.bf16.msra.mxu0 0
        %1151 = vmatpush.bf16.msra.mxu0 0
        %1152 = vmatpush.bf16.msra.mxu0 0
        %1153 = vmatpush.bf16.msra.mxu0 0
        %1154 = vmatpush.bf16.msra.mxu0 0
        %1155 = vmatpush.bf16.msra.mxu0 0
        %1156 = vmatpush.bf16.msra.mxu0 %v1147
        %1157 = vmatmul.bf16.gmra.mxu0 %v1144
        %v1158 = vpop.f32.mrf.mxu0
        %v1159 = vadd.f32 0.0, %v1158
        %v1160 = vpop.f32.mrf.mxu0
        %1161 = vdwg.mxu0
        %v1163 = vsel %vm919, %v1103, 0
        %v1166 = vsel %vm1107, %v918, 0
        %1168 = vmatpush.bf16.msra.mxu0 0
        %1169 = vmatpush.bf16.msra.mxu0 0
        %1170 = vmatpush.bf16.msra.mxu0 0
        %1171 = vmatpush.bf16.msra.mxu0 0
        %1172 = vmatpush.bf16.msra.mxu0 0
        %1173 = vmatpush.bf16.msra.mxu0 0
        %1174 = vmatpush.bf16.msra.mxu0 0
        %1175 = vmatpush.bf16.msra.mxu0 %v1166
        %1176 = vmatmul.bf16.gmra.mxu0 %v1163
        %v1177 = vpop.f32.mrf.mxu0
        %v1178 = vadd.f32 0.0, %v1177
        %v1179 = vpop.f32.mrf.mxu0
        %1180 = vdwg.mxu0
        %v1181 = vrot.slane %v1159, 4
        %vm1182 = vcmask 1047556
        %v1183 = vsel %vm1182, %v1181, %v1121
        %v1184 = vrot.slane %v1121, 4
        %v1185 = vsel %vm1182, %v1159, %v1184
        %v1187 = vunpack.c.l.s4 1983009808
        %v1188 = vunpack.c.0.s8 %v1187
        %v1189 = vperm.slane %v1183, %v1188
        %v1191 = vunpack.c.l.s4 1983009808
        %v1192 = vunpack.c.0.s8 %v1191
        %v1193 = vperm.slane %v1185, %v1192
        %v1194 = vrot.slane %v1178, 4
        %v1195 = vsel %vm1182, %v1194, %v1140
        %v1196 = vrot.slane %v1140, 4
        %v1197 = vsel %vm1182, %v1178, %v1196
        %v1199 = vunpack.c.l.s4 1983009808
        %v1200 = vunpack.c.0.s8 %v1199
        %v1201 = vperm.slane %v1195, %v1200
        %v1203 = vunpack.c.l.s4 1983009808
        %v1204 = vunpack.c.0.s8 %v1203
        %v1205 = vperm.slane %v1197, %v1204
        %v1206 = vrot.slane %v1201, 4
        %v1207 = vsel %vm1182, %v1206, %v1189
        %v1208 = vrot.slane %v1189, 4
        %v1209 = vsel %vm1182, %v1201, %v1208
        %v1211 = vunpack.c.l.s4 1934713408
        %v1212 = vunpack.c.0.s8 %v1211
        %v1213 = vperm.slane %v1207, %v1212
        %v1215 = vunpack.c.l.s4 1934713408
        %v1216 = vunpack.c.0.s8 %v1215
        %v1217 = vperm.slane %v1209, %v1216
        %v1218 = vrot.slane %v1205, 4
        %v1219 = vsel %vm1182, %v1218, %v1193
        %v1220 = vrot.slane %v1193, 4
        %v1221 = vsel %vm1182, %v1205, %v1220
        %v1223 = vunpack.c.l.s4 1934713408
        %v1224 = vunpack.c.0.s8 %v1223
        %v1225 = vperm.slane %v1219, %v1224
        %v1227 = vunpack.c.l.s4 1934713408
        %v1228 = vunpack.c.0.s8 %v1227
        %v1229 = vperm.slane %v1221, %v1228
        %v1230 = vrot.slane %v1213, 4
        %v1231 = vsel %vm1182, 0.0, %v1230
        %v1232 = vrot.slane %v1217, 4
        %v1233 = vsel %vm1182, 0.0, %v1232
        %v1234 = vrot.slane %v1225, 4
        %v1235 = vsel %vm1182, 0.0, %v1234
        %v1236 = vrot.slane %v1229, 4
        %v1237 = vsel %vm1182, 0.0, %v1236
        %v1238 = vsel %vm1182, %v1232, %v1213
        %v1240 = vunpack.c.l.s4 1983009808
        %v1241 = vunpack.c.0.s8 %v1240
        %v1242 = vperm.slane %v1238, %v1241
        %v1243 = vrot.slane %v1233, 4
        %v1244 = vsel %vm1182, %v1243, %v1231
        %v1246 = vunpack.c.l.s4 1983009808
        %v1247 = vunpack.c.0.s8 %v1246
        %v1248 = vperm.slane %v1244, %v1247
        %v1249 = vsel %vm1182, %v1236, %v1225
        %v1251 = vunpack.c.l.s4 1983009808
        %v1252 = vunpack.c.0.s8 %v1251
        %v1253 = vperm.slane %v1249, %v1252
        %v1254 = vrot.slane %v1237, 4
        %v1255 = vsel %vm1182, %v1254, %v1235
        %v1257 = vunpack.c.l.s4 1983009808
        %v1258 = vunpack.c.0.s8 %v1257
        %v1259 = vperm.slane %v1255, %v1258
        %v1260 = vrot.slane %v1248, 4
        %v1261 = vsel %vm1182, %v1260, %v1242
        %v1262 = vrot.slane %v1242, 4
        %v1263 = vsel %vm1182, %v1248, %v1262
        %v1265 = vunpack.c.l.s4 1934713408
        %v1266 = vunpack.c.0.s8 %v1265
        %v1267 = vperm.slane %v1261, %v1266
        %v1269 = vunpack.c.l.s4 1934713408
        %v1270 = vunpack.c.0.s8 %v1269
        %v1271 = vperm.slane %v1263, %v1270
        %v1272 = vrot.slane %v1259, 4
        %v1273 = vsel %vm1182, %v1272, %v1253
        %v1274 = vrot.slane %v1253, 4
        %v1275 = vsel %vm1182, %v1259, %v1274
        %v1277 = vunpack.c.l.s4 1934713408
        %v1278 = vunpack.c.0.s8 %v1277
        %v1279 = vperm.slane %v1273, %v1278
        %v1281 = vunpack.c.l.s4 1934713408
        %v1282 = vunpack.c.0.s8 %v1281
        %v1283 = vperm.slane %v1275, %v1282
        %v1284 = vrot.slane %v1279, 4
        %v1285 = vsel %vm1182, %v1284, %v1267
        %v1286 = vrot.slane %v1267, 4
        %v1287 = vsel %vm1182, %v1279, %v1286
        %v1288 = vrot.slane %v1283, 4
        %v1289 = vsel %vm1182, %v1288, %v1271
        %v1290 = vrot.slane %v1271, 4
        %v1291 = vsel %vm1182, %v1283, %v1290
        %1293 = vrot.lane.b32.xlu0 %v1287, 8
        %v1294 = vpop.permute.xlu0 %1293
        %1297 = vrot.lane.b32.xlu0 %v1289, 16
        %v1298 = vpop.permute.xlu0 %1297
        %1301 = vrot.lane.b32.xlu0 %v1291, 24
        %v1302 = vpop.permute.xlu0 %1301
        %v1304 = vsel %vm919, %v1285, %v1294
        %vm1305 = vcmask 130048
        %v1306 = vsel %vm1305, %v1304, %v1298
        %vm1307 = vcmask 195584
        %v1308 = vsel %vm1307, %v1306, %v1302
        %v1309 = vpack.c.bf16 %v1308, %v1308
        %v1311 = vperm.slane %v460, 0
        %v1317 = vunpack.c.l.b16 %v456
        %v1318 = vunpack.c.l.b16 %v457
        %v1319 = vunpack.c.l.b16 %v458
        %v1320 = vunpack.c.l.b16 %v459
        %v1321 = vpack.c.b16 %v1318, %v1317
        %v1322 = vpack.c.b16 %v1320, %v1319
        %v1326 = vsel %vm476, %v1309, 0
        %1328 = vmatpush.bf16.msra.mxu0 0
        %1329 = vmatpush.bf16.msra.mxu0 0
        %1330 = vmatpush.bf16.msra.mxu0 0
        %1331 = vmatpush.bf16.msra.mxu0 0
        %1332 = vmatpush.bf16.msra.mxu0 0
        %1333 = vmatpush.bf16.msra.mxu0 0
        %1334 = vmatpush.bf16.msra.mxu0 %v1322
        %1335 = vmatpush.bf16.msra.mxu0 %v1321
        %1336 = vmatmul.bf16.gmra.mxu0 %v1326
        %v1337 = vpop.f32.mrf.mxu0
        %v1338 = vadd.f32 %v1311, %v1337
        %v1339 = vpop.f32.mrf.mxu0
        %1340 = vdwg.mxu0
        %v1341 = vadd.f32 %v475, %v1338
        %v1342 = vsel %vm476, %v1341, 0.0
        %1343 = vadd.xlane.f32.xlu0 %v1342
        %v1344 = vpop.xlane.xlu0 %1343
        %v1345 = vmul.f32 %v1344, %v486
        %v1346 = vsub.f32 %v1341, %v1345
        %v1347 = vmul.f32 %v1346, %v1346
        %v1348 = vsel %vm476, %v1347, 0.0
        %1349 = vadd.xlane.f32.xlu0 %v1348
        %v1350 = vpop.xlane.xlu0 %1349
        %v1351 = vmul.f32 %v1350, %v486
        %v1352 = vadd.f32 %v1351, 1e-05
        %v1353 = vrsqrt.pop %v1352
        %v1354 = vmul.f32 %v1353, %v1352
        %v1355 = vmul.f32 %v1354, %v1353
        %v1356 = vmul.f32 0.5, %v1355
        %v1357 = vsub.f32 1.5, %v1356
        %v1358 = vmul.f32 %v1353, %v1357
        %vm1359 = vweird.f32 %v1352
        %vm1360 = vweird.f32 %v1353
        %vm1361 = vmor %vm1359, %vm1360
        %v1362 = vsel %vm1361, %v1353, %v1358
        %v1363 = vmul.f32 %v1346, %v1362
        %v1365 = vperm.slane %v450, 0
        %v1367 = vmul.f32 %v1363, %v1365
        %v1369 = vperm.slane %v451, 0
        %v1371 = vadd.f32 %v1367, %v1369
        %v1372 = vpack.c.bf16 %v1371, %v1371
        %v1374 = vperm.slane %v465, 0
        %v1380 = vunpack.c.l.b16 %v461
        %v1381 = vunpack.c.l.b16 %v462
        %v1382 = vunpack.c.l.b16 %v463
        %v1383 = vunpack.c.l.b16 %v464
        %v1384 = vpack.c.b16 %v1381, %v1380
        %v1385 = vpack.c.b16 %v1383, %v1382
        %v1389 = vsel %vm476, %v1372, 0
        %1391 = vmatpush.bf16.msra.mxu0 0
        %1392 = vmatpush.bf16.msra.mxu0 0
        %1393 = vmatpush.bf16.msra.mxu0 0
        %1394 = vmatpush.bf16.msra.mxu0 0
        %1395 = vmatpush.bf16.msra.mxu0 0
        %1396 = vmatpush.bf16.msra.mxu0 0
        %1397 = vmatpush.bf16.msra.mxu0 %v1385
        %1398 = vmatpush.bf16.msra.mxu0 %v1384
        %1399 = vmatmul.bf16.gmra.mxu0 %v1389
        %v1400 = vpop.f32.mrf.mxu0
        %v1401 = vadd.f32 %v1374, %v1400
        %v1402 = vpop.f32.mrf.mxu0
        %1403 = vdwg.mxu0
        %v1404 = vmul.f32 %v1401, 0.5
        %v1405 = vmul.f32 %v1401, 0.70710677
        %v1406 = vmul.f32 %v1405, %v1405
        %v1407 = vmin.f32 16.0, %v1406
        %v1408 = vmul.f32 %v1407, 2.1237322e-06
        %v1409 = vadd.f32 %v1408, 0.00028619796
        %v1410 = vmul.f32 %v1407, %v1409
        %v1411 = vadd.f32 %v1410, 0.0036580483
        %v1412 = vmul.f32 %v1407, %v1411
        %v1413 = vadd.f32 %v1412, 0.05243302
        %v1414 = vmul.f32 %v1407, %v1413
        %v1415 = vadd.f32 %v1414, 0.18741608
        %v1416 = vmul.f32 %v1407, %v1415
        %v1417 = vadd.f32 %v1416, 1.1283791
        %v1418 = vmul.f32 %v1405, %v1417
        %v1419 = vmul.f32 %v1407, 3.8918573e-05
        %v1420 = vadd.f32 %v1419, 0.001143296
        %v1421 = vmul.f32 %v1407, %v1420
        %v1422 = vadd.f32 %v1421, 0.014752088
        %v1423 = vmul.f32 %v1407, %v1422
        %v1424 = vadd.f32 %v1423, 0.112945676
        %v1425 = vmul.f32 %v1407, %v1424
        %v1426 = vadd.f32 %v1425, 0.4994258
        %v1427 = vmul.f32 %v1407, %v1426
        %v1428 = vadd.f32 %v1427, 1.0
        %v1429 = vrcp.pop %v1428
        %v1430 = vmul.f32 %v1428, %v1429
        %v1431 = vsub.f32 1.0, %v1430
        %v1432 = vmul.f32 %v1429, %v1431
        %v1433 = vadd.f32 %v1429, %v1432
        %vm1434 = vweird.f32 %v1428
        %vm1435 = vweird.f32 %v1429
        %vm1436 = vmor %vm1434, %vm1435
        %v1437 = vsel %vm1436, %v1429, %v1433
        %v1438 = vand.u32 2147483647, %v1428
        %vm1439 = vcmp.eq.f32.partialorder %v1438, 8.507059e+37
        %v1440 = vand.u32 %v1428, 2147483648
        %v1441 = vor.u32 1.1754944e-38, %v1440
        %v1442 = vsel %vm1439, %v1441, %v1437
        %v1443 = vmul.f32 %v1418, %v1442
        %v1444 = vmin.f32 %v1443, 1.0
        %v1445 = vmax.f32 %v1444, -1.0
        %v1446 = vadd.f32 %v1445, 1.0
        %v1447 = vmul.f32 %v1404, %v1446
        %v1448 = vpack.c.bf16 %v1447, %v1447
        %v1450 = vperm.slane %v474, 0
        %v1460 = vunpack.c.l.b16 %v466
        %v1461 = vunpack.c.l.b16 %v467
        %v1462 = vunpack.c.l.b16 %v468
        %v1463 = vunpack.c.l.b16 %v469
        %v1464 = vunpack.c.l.b16 %v470
        %v1465 = vunpack.c.l.b16 %v471
        %v1466 = vunpack.c.l.b16 %v472
        %v1467 = vunpack.c.l.b16 %v473
        %v1468 = vpack.c.b16 %v1461, %v1460
        %v1469 = vpack.c.b16 %v1463, %v1462
        %v1470 = vpack.c.b16 %v1465, %v1464
        %v1471 = vpack.c.b16 %v1467, %v1466
        %vm1476 = vcmask 523264
        %v1478 = vsel %vm1476, %v1448, 0
        %1480 = vmatpush.bf16.msra.mxu0 0
        %1481 = vmatpush.bf16.msra.mxu0 0
        %1482 = vmatpush.bf16.msra.mxu0 0
        %1483 = vmatpush.bf16.msra.mxu0 0
        %1484 = vmatpush.bf16.msra.mxu0 %v1471
        %1485 = vmatpush.bf16.msra.mxu0 %v1470
        %1486 = vmatpush.bf16.msra.mxu0 %v1469
        %1487 = vmatpush.bf16.msra.mxu0 %v1468
        %1488 = vmatmul.bf16.gmra.mxu0 %v1478
        %v1489 = vpop.f32.mrf.mxu0
        %v1490 = vadd.f32 %v1450, %v1489
        %v1491 = vpop.f32.mrf.mxu0
        %1492 = vdwg.mxu0
        %v1493 = vadd.f32 %v1341, %v1490
        %1494 = vst.msk [vmem:[%s446] sm:$0xff] %vm476, %v1493
        %p1495 = scmp.lt.s32.totalorder %s28, 1
        %s1496 = scalar_select %p1495, %s28, 1
        %s1497 = smul.addr %s1496, 8
        %s1498 = scalar_lea.vmem %s12, %s1497
        %s1499 = sand.u32 %s319, 1
        %s1500 = scalar_lea.sflag [#allocation3], %s1499
        %s1501 = sand.u32 %s319, 1
        %s1502 = smul.addr %s1501, 32
        %s1503 = scalar_lea.vmem [#allocation2], %s1502
        // Predicated region
        $region69: #{transformer_forward.2} parent=67 // pred_check
          %p1504 = pneg %p303
        $region70: #{transformer_forward.2} parent=67 // pred_check_branch
          %1506 = sbr.rel (%p1504) target = $region72
        $region71: #{transformer_forward.2} parent=67 // pred_region
          _
        $region72: #{transformer_forward.2} parent=67 // pred_fallthru
          _
        // Predicated region
        $region73: #{transformer_forward.2} parent=67 // pred_check
          %p1507 = pneg %p329
        $region74: #{transformer_forward.2} parent=67 // pred_check_branch
          %1509 = sbr.rel (%p1507) target = $region76
        $region75: #{transformer_forward.2} parent=67 // pred_region
          %1511 = vsyncadd %s1500, 0
          %s1512 = smul.addr %s28, 4
          %s1513 = smul.addr %s1512, 8
          %s1514 = scalar_lea.hbm %s13, %s1513
          %s1515 = sshll.u32 %s1503, 4
          %s1516 = int_to_ptr.vmem [resolvable:$true] %s1515
          %s1517 = sshll.u32 %s1514, 4
          %s1518 = int_to_ptr.hbm [resolvable:$true] %s1517
          %1523 = dma.vmem_to_hbm [thread:$0]  %s1516, 512, %s1518, %s1500, 128, 128, 8
        $region76: #{transformer_forward.2} parent=67 // pred_fallthru
          _
      $region68: #{transformer_forward.2} parent=5 // pred_fallthru
        _
      %p1524 = scmp.le.s32.totalorder 2, %s23
      // Predicated region
      $region77: #{transformer_forward.2} parent=5 // pred_check
        %p1525 = pneg %p1524
      $region78: #{transformer_forward.2} parent=5 // pred_check_branch
        %1527 = sbr.rel (%p1525) target = $region80
      $region79: #{transformer_forward.2} parent=5 // pred_region
        %s1528 = ssub.s32 %s23, 2
        // Predicated region
        $region81: #{transformer_forward.2} parent=79 // pred_check
          %p1529 = pneg %p309
        $region82: #{transformer_forward.2} parent=79 // pred_check_branch
          %1531 = sbr.rel (%p1529) target = $region84
        $region83: #{transformer_forward.2} parent=79 // pred_region
          %p1532 = scmp.lt.s32.totalorder %s29, 1
          %s1533 = scalar_select %p1532, %s29, 1
          %s1534 = smul.addr %s1533, 8
          %s1535 = scalar_lea.vmem %s12, %s1534
        $region84: #{transformer_forward.2} parent=79 // pred_fallthru
          _
        // Predicated region
        $region85: #{transformer_forward.2} parent=79 // pred_check
          %p1536 = pneg %p335
        $region86: #{transformer_forward.2} parent=79 // pred_check_branch
          %1538 = sbr.rel (%p1536) target = $region88
        $region87: #{transformer_forward.2} parent=79 // pred_region
          %s1539 = sand.u32 %s320, 1
          %s1540 = scalar_lea.sflag [#allocation3], %s1539
          %s1541 = sand.u32 %s320, 1
          %s1542 = smul.addr %s1541, 32
          %s1543 = scalar_lea.vmem [#allocation2], %s1542
          %1545 = dma.done %s1540, 512
        $region88: #{transformer_forward.2} parent=79 // pred_fallthru
          _
      $region80: #{transformer_forward.2} parent=5 // pred_fallthru
        _
    $region6: #{transformer_forward.2} parent=1 // loop_footer
      %s27 = sadd.s32 1, %s23
    $region7: #{transformer_forward.2} parent=1 // loop_footer_branch
      %22 = sbr.rel target = $region3
    $region8: #{transformer_forward.2} parent=1 // loop_exit
      _
    %1546 = vsyncpa [#allocation3], 1
    %s1547 = scalar_lea.sflag [#allocation3], 1
    %1548 = vsyncpa %s1547, 1

</llo_original>
